<compile_context>
chip_gen: v7x
topology: tpu7x:2x2x1
jax: 0.10.0
libtpu: 0.0.40
codegen_flags: <defaults>
</compile_context>

<pallas_src>
import numpy as np
import jax
import jax.numpy as jnp
from jax.experimental import pallas as pl
from jax.experimental.pallas import tpu as pltpu


# -----------------------------------------------------------------------------
# Static skeleton index tables (copied verbatim from the PyTorch module).
# -----------------------------------------------------------------------------
MID_GROUP = [0, 1, 2, 3, 5, 6, 4, 7, 8, 9, 10, 11, 12, 20, 13, 19, 14, 18, 15, 17, 16, 38,
             21, 25, 22, 24, 23, 26, 27, 29, 28, 30, 31, 34, 32, 35, 33, 36, 37, 39, 40, 41,
             42, 43, 44, 45, 46, 57, 47, 58, 48, 59, 49, 60, 50, 61, 51, 62, 52, 63, 53, 64,
             54, 65, 55, 66, 56, 67]

INV_LOW = [0, 0, 1, 1, 2, 2, 3, 3, 4, 4, 5, 5, 6, 7, 8, 9, 10, 9, 8, 7, 6, 11, 12, 13, 12,
           11, 13, 14, 15, 14, 15, 16, 17, 18, 16, 17, 18, 19, 10, 19, 20, 20, 21, 21, 22,
           22, 23, 24, 25, 26, 27, 28, 29, 30, 31, 32, 33, 23, 24, 25, 26, 27, 28, 29, 30,
           31, 32, 33]

INV_MID = [2, 0, 0, 1, 1, 3, 3, 5, 4, 5, 4, 7, 6, 7, 6, 9, 8, 11, 11, 9, 10, 10, 8, 12, 12,
           13, 13, 14, 14, 15, 15, 16, 17, 17, 18, 18, 19, 19, 20, 20, 21, 21, 22, 22, 23,
           23, 24, 24, 25, 25, 26, 26, 27, 27, 28, 28, 29, 30, 30, 31, 32, 32, 31, 33, 33,
           34, 35, 35, 34, 36, 36, 37, 37, 38, 29, 38, 39, 39, 40, 40, 16, 41, 41, 42, 42,
           43, 43, 44, 44, 45, 45, 46, 47, 47, 48, 48, 49, 49, 50, 50, 51, 51, 52, 52, 53,
           53, 54, 54, 55, 55, 56, 56, 57, 58, 58, 59, 59, 60, 60, 61, 61, 62, 62, 63, 63,
           64, 64, 65, 65, 66, 66, 67, 67]

# Synthetic nodes_group for the 133-joint level: sum(nodes_group, []) must hold 136 indices
# (pairs averaged down to 68 joints).  The real grouping is a model-specific constructor arg.
HIGH_GROUP = list(range(133)) + [44, 88, 132]

ADJ_MID_EDGES = ([[0, 2], [1, 2], [2, 3], [3, 4], [3, 5], [3, 7], [3, 6], [6, 8], [7, 9],
                  [8, 10], [9, 11]]
                 + [[2, i] for i in range(12, 46)]
                 + [[5, 46], [46, 47], [47, 48], [46, 49], [49, 50], [46, 51], [51, 52],
                    [46, 53], [53, 54], [46, 55], [55, 56], [4, 57], [57, 58], [58, 59],
                    [57, 60], [60, 61], [57, 62], [62, 63], [57, 64], [64, 65], [57, 66],
                    [66, 67]])

ADJ_LOW_EDGES = ([[0, 1], [1, 2], [2, 3], [3, 4], [4, 5]]
                 + [[1, i] for i in range(6, 23)]
                 + [[2, 23], [23, 24], [24, 25], [23, 26], [26, 27], [23, 28], [28, 29],
                    [23, 30], [30, 31], [23, 32], [32, 33]])

ADJ_HIGH_EDGES = [[i, i + 1] for i in range(132)]  # synthetic 133-joint adjacency (chain)


# -----------------------------------------------------------------------------
# Joint-count / slab-layout constants (joint dims padded to sublane multiples of 8).
# -----------------------------------------------------------------------------
JH, JM, JL = 133, 68, 34


def _pad8(n):
    return (n + 7) // 8 * 8


JH_P, JM_P, JL_P = _pad8(JH), _pad8(JM), _pad8(JL)     # 136, 72, 40

# Row offsets of each constant matrix inside the packed bf16 slab (all multiples of 8).
OFF_A1 = 0                       # A_high           (JH_P, JH_P)
OFF_A2P = OFF_A1 + JH_P          # A_mid @ P_high   (JM_P, JH_P)
OFF_A3P = OFF_A2P + JM_P         # A_low @ P_mid    (JL_P, JM_P)
OFF_AMID = OFF_A3P + JL_P        # A_mid            (JM_P, JM_P)
OFF_ULOW = OFF_AMID + JM_P       # U_low            (JM_P, JL_P)
OFF_UMID = OFF_ULOW + JM_P       # U_mid            (JH_P, JM_P)
CONST_ROWS = OFF_UMID + JH_P     # 528
CONST_COLS = JH_P                # 136


# -----------------------------------------------------------------------------
# Constant matrices: adjacency, pooling (gather + AvgPool1d(2,2)), unpooling (gather).
# -----------------------------------------------------------------------------
def normalized_adjacency(edges, n):
    """adj_mx_from_edges equivalent: symmetric adjacency + self loops, row-normalized."""
    a = np.zeros((n, n), dtype=np.float32)
    for i, j in edges:
        a[i, j] = 1.0
        a[j, i] = 1.0
    a = a + np.eye(n, dtype=np.float32)
    return a / a.sum(axis=1, keepdims=True)


def pooling_matrix(group, n_in):
    """P (K, n_in): row k averages joints group[2k], group[2k+1]  (gather + AvgPool1d(2,2))."""
    k = len(group) // 2
    p = np.zeros((k, n_in), dtype=np.float32)
    for i in range(k):
        p[i, group[2 * i]] += 0.5
        p[i, group[2 * i + 1]] += 0.5
    return p


def unpool_matrix(inv, n_in):
    """U (len(inv), n_in): row i selects joint inv[i]  (gather x[:, inv])."""
    u = np.zeros((len(inv), n_in), dtype=np.float32)
    for i, j in enumerate(inv):
        u[i, j] = 1.0
    return u


def build_static_matrices():
    a_high = normalized_adjacency(ADJ_HIGH_EDGES, 133)
    a_mid = normalized_adjacency(ADJ_MID_EDGES, 68)
    a_low = normalized_adjacency(ADJ_LOW_EDGES, 34)
    p_high = pooling_matrix(HIGH_GROUP, 133)      # (68, 133)
    p_mid = pooling_matrix(MID_GROUP, 68)         # (34, 68)
    u_low = unpool_matrix(INV_LOW, 34)            # (68, 34)
    u_mid = unpool_matrix(INV_MID, 68)            # (133, 68)
    return dict(a_high=a_high, a_mid=a_mid, a_low=a_low,
                p_high=p_high, p_mid=p_mid, u_low=u_low, u_mid=u_mid)


# -----------------------------------------------------------------------------
# Parameters: deterministic construction, bias + eval-mode BatchNorm folded into (W', shift').
# -----------------------------------------------------------------------------
def make_layer_params(key, cin, cout):
    k1, k2, k3, k4 = jax.random.split(key, 4)
    w = jax.random.normal(k1, (cin, cout), jnp.float32) / np.sqrt(cin)
    b = 0.01 * jax.random.normal(k2, (1, cout), jnp.float32)
    gamma = 1.0 + 0.1 * jax.random.normal(k3, (cout,), jnp.float32)
    beta = 0.1 * jax.random.normal(k4, (cout,), jnp.float32)
    running_mean = jnp.zeros((cout,), jnp.float32)
    running_var = jnp.ones((cout,), jnp.float32)
    eps = 1e-5
    inv_std = gamma / jnp.sqrt(running_var + eps)             # BN scale
    bn_shift = beta - running_mean * inv_std                  # BN shift
    w_folded = w * inv_std[None, :]                           # W' = W * scale
    shift_folded = b * inv_std[None, :] + bn_shift[None, :]   # shift' = b*scale + shift  (1, cout)
    return w_folded, shift_folded


def make_hourglass_params(key, input_dim, output_dim, hid1, hid2):
    dims = [(input_dim, hid1), (hid1, hid2), (hid2, hid2), (hid2, hid1), (hid1, output_dim)]
    keys = jax.random.split(key, len(dims))
    return [make_layer_params(k, cin, cout) for k, (cin, cout) in zip(keys, dims)]


# -----------------------------------------------------------------------------
# Operand packing: 3 resident slabs (constants bf16 / kron weights bf16 / shifts f32).
# -----------------------------------------------------------------------------
def build_kernel_operands(static, params, b_chunk):
    """Pack everything the kernel needs into 3 slabs (one DMA each):
         consts : (528, 136)      bf16  adjacency, pool-folded adjacency, unpool matrices
         wslab  : (5*lane, lane)  bf16  block-diagonal kron(I_Bchunk, W') per layer
         sslab  : (8, lane)       f32   folded bias+BN shift rows, tiled over the chunk
       All padding entries are exact zeros, so padded rows / lanes never contaminate
       real outputs downstream.
    """
    dims = [(int(w.shape[0]), int(w.shape[1])) for (w, _) in params]
    max_c = max(max(cin, cout) for cin, cout in dims)
    lane = max(128, -(-(b_chunk * max_c) // 128) * 128)

    consts = np.zeros((CONST_ROWS, CONST_COLS), np.float32)
    consts[OFF_A1:OFF_A1 + JH, :JH] = static["a_high"]
    consts[OFF_A2P:OFF_A2P + JM, :JH] = static["a_mid"] @ static["p_high"]
    consts[OFF_A3P:OFF_A3P + JL, :JM] = static["a_low"] @ static["p_mid"]
    consts[OFF_AMID:OFF_AMID + JM, :JM] = static["a_mid"]
    consts[OFF_ULOW:OFF_ULOW + JM, :JL] = static["u_low"]
    consts[OFF_UMID:OFF_UMID + JH, :JM] = static["u_mid"]

    eye = np.eye(b_chunk, dtype=np.float32)
    wslab = np.zeros((5 * lane, lane), np.float32)
    sslab = np.zeros((8, lane), np.float32)
    for l, (w, s) in enumerate(params):
        wk = np.kron(eye, np.asarray(w, np.float32))             # (Bc*cin, Bc*cout)
        wslab[l * lane:l * lane + wk.shape[0], :wk.shape[1]] = wk
        st = np.tile(np.asarray(s, np.float32), (1, b_chunk))    # (1, Bc*cout)
        sslab[l, :st.shape[1]] = st[0]

    return (jnp.asarray(consts, jnp.bfloat16),
            jnp.asarray(wslab, jnp.bfloat16),
            jnp.asarray(sslab, jnp.float32))


# -----------------------------------------------------------------------------
# The fused Pallas kernel: whole hourglass for one lane-packed batch chunk.
# Activations live as (J_pad, lane): joints on sublanes, (batch-chunk x channels) on lanes.
# -----------------------------------------------------------------------------
def _hourglass_kernel(x_ref, c_ref, w_ref, s_ref, o_ref):
    bf16 = jnp.bfloat16
    lane = w_ref.shape[1]

    def mm(a, b):  # bf16 MXU matmul, f32 accumulation
        return jnp.dot(a, b, preferred_element_type=jnp.float32)

    # Packed constants (bf16): static, sublane-aligned slices of the resident slab.
    a1 = c_ref[OFF_A1:OFF_A1 + JH_P, :JH_P]          # A_high          (136, 136)
    a2p = c_ref[OFF_A2P:OFF_A2P + JM_P, :JH_P]       # A_mid @ P_high  (72, 136)
    a3p = c_ref[OFF_A3P:OFF_A3P + JL_P, :JM_P]       # A_low @ P_mid   (40, 72)
    amid = c_ref[OFF_AMID:OFF_AMID + JM_P, :JM_P]    # A_mid           (72, 72)
    ulow = c_ref[OFF_ULOW:OFF_ULOW + JM_P, :JL_P]    # U_low           (72, 40)
    umid = c_ref[OFF_UMID:OFF_UMID + JH_P, :JM_P]    # U_mid           (136, 72)

    # Packed block-diagonal kron weights (bf16) and shift rows (f32).
    w1 = w_ref[0 * lane:1 * lane, :]
    w2 = w_ref[1 * lane:2 * lane, :]
    w3 = w_ref[2 * lane:3 * lane, :]
    w4 = w_ref[3 * lane:4 * lane, :]
    w5 = w_ref[4 * lane:5 * lane, :]
    s1 = s_ref[0:1, :]
    s2 = s_ref[1:2, :]
    s3 = s_ref[2:3, :]
    s4 = s_ref[3:4, :]
    s5 = s_ref[4:5, :]

    x_f = x_ref[...]                      # (136, lane) f32 — kept for the final residual
    x_b = x_f.astype(bf16)                # hoisted: cast once, reused

    # L1 (133-joint graph conv, Cin -> hid1): adjacency applied first.
    skip2 = jnp.maximum(mm(mm(a1, x_b).astype(bf16), w1) + s1, 0.0)          # (136, lane) f32
    skip2_b = skip2.astype(bf16)                                             # hoisted cast

    # L2 (pool folded: A2' = A_mid @ P_high), hid1 -> hid2.
    skip3 = jnp.maximum(mm(a2p, mm(skip2_b, w2).astype(bf16)) + s2, 0.0)     # (72, lane)
    skip3_b = skip3.astype(bf16)                                             # hoisted cast

    # L3 (pool folded: A3' = A_low @ P_mid), hid2 -> hid2.
    h3 = jnp.maximum(mm(a3p, mm(skip3_b, w3).astype(bf16)) + s3, 0.0)        # (40, lane)

    # L4: unpool via U_low matmul + skip3 residual, hid2 -> hid1.
    z4 = (mm(ulow, h3.astype(bf16)) + skip3).astype(bf16)                    # (72, lane)
    h4 = jnp.maximum(mm(mm(amid, z4).astype(bf16), w4) + s4, 0.0)            # (72, lane)

    # L5: unpool via U_mid matmul + skip2 residual, hid1 -> Cout.
    z5 = (mm(umid, h4.astype(bf16)) + skip2).astype(bf16)                    # (136, lane)
    h5 = jnp.maximum(mm(a1, mm(z5, w5).astype(bf16)) + s5, 0.0)              # (136, lane)

    # Final residual (ReLU already applied inside L5, matching the reference).
    # Lane-dense unmasked store: full (136, lane) f32 block.
    o_ref[...] = h5 + x_f


def hourglass_fused(x, consts, wslab, sslab, *, b_chunk, cout):
    """x: (B, 133, Cin) f32 -> (B, 133, Cout) f32.  Single fused pallas_call; grid over
    lane-packed batch chunks ("parallel" -> both v7x TensorCores when >1 chunk)."""
    B, J, cin = x.shape
    assert J == JH
    lane = sslab.shape[1]
    num_chunks = int(pl.cdiv(B, b_chunk))
    b_pad = num_chunks * b_chunk

    # (chunks, J_pad, lane): joints on sublanes, (batch-chunk x channels) on lanes; zero pad.
    xp = jnp.zeros((b_pad, J, cin), jnp.float32).at[:B].set(x)
    xc = xp.reshape(num_chunks, b_chunk, J, cin).transpose(0, 2, 1, 3)
    xc = xc.reshape(num_chunks, J, b_chunk * cin)
    xk = jnp.zeros((num_chunks, JH_P, lane), jnp.float32).at[:, :J, :b_chunk * cin].set(xc)

    mmf = lambda m, k, n: 2 * m * k * n
    flops = num_chunks * (
        mmf(JH_P, JH_P, lane) + mmf(JH_P, lane, lane)                                  # L1
        + mmf(JH_P, lane, lane) + mmf(JM_P, JH_P, lane)                                # L2
        + mmf(JM_P, lane, lane) + mmf(JL_P, JM_P, lane)                                # L3
        + mmf(JM_P, JL_P, lane) + mmf(JM_P, JM_P, lane) + mmf(JM_P, lane, lane)        # L4
        + mmf(JH_P, JM_P, lane) + mmf(JH_P, lane, lane) + mmf(JH_P, JH_P, lane))       # L5
    bytes_accessed = int(xk.size * 4 + consts.size * 2 + wslab.size * 2
                         + sslab.size * 4 + num_chunks * JH_P * lane * 4)

    out = pl.pallas_call(
        _hourglass_kernel,
        out_shape=jax.ShapeDtypeStruct((num_chunks, JH_P, lane), jnp.float32),
        grid=(num_chunks,),
        in_specs=[
            pl.BlockSpec((None, JH_P, lane), lambda i: (i, 0, 0)),   # activation chunk
            pl.BlockSpec(consts.shape, lambda i: (0, 0)),            # packed constants (resident)
            pl.BlockSpec(wslab.shape, lambda i: (0, 0)),             # packed kron weights
            pl.BlockSpec(sslab.shape, lambda i: (0, 0)),             # packed shifts
        ],
        out_specs=pl.BlockSpec((None, JH_P, lane), lambda i: (i, 0, 0)),
        compiler_params=pltpu.CompilerParams(dimension_semantics=("parallel",)),
        cost_estimate=pl.CostEstimate(flops=int(flops), transcendentals=0,
                                      bytes_accessed=bytes_accessed),
    )(xk, consts, wslab, sslab)

    out = out[:, :J, :b_chunk * cout]
    out = out.reshape(num_chunks, J, b_chunk, cout).transpose(0, 2, 1, 3)
    return out.reshape(b_pad, J, cout)[:B]


# -----------------------------------------------------------------------------
# Pure-JAX reference (gather-based pool/unpool) for a correctness sanity check.
# -----------------------------------------------------------------------------
def hourglass_reference(x, params, static):
    a_high = jnp.asarray(static["a_high"])
    a_mid = jnp.asarray(static["a_mid"])
    a_low = jnp.asarray(static["a_low"])
    high_group = jnp.asarray(HIGH_GROUP, jnp.int32)
    mid_group = jnp.asarray(MID_GROUP, jnp.int32)
    inv_mid = jnp.asarray(INV_MID, jnp.int32)
    inv_low = jnp.asarray(INV_LOW, jnp.int32)

    def gconv(h, adj, w, shift):
        y = jnp.einsum("ij,bjc->bic", adj, h @ w) + shift
        return jnp.maximum(y, 0.0)

    def pool(h, group):
        g = h[:, group]
        b, l, c = g.shape
        return g.reshape(b, l // 2, 2, c).mean(axis=2)

    def unpool(h, inv):
        return h[:, inv]

    skip1 = x
    skip2 = gconv(skip1, a_high, *params[0])
    skip3 = gconv(pool(skip2, high_group), a_mid, *params[1])
    out = gconv(pool(skip3, mid_group), a_low, *params[2])
    out = gconv(unpool(out, inv_low) + skip3, a_mid, *params[3])
    out = gconv(unpool(out, inv_mid) + skip2, a_high, *params[4])
    return out + skip1


if __name__ == "__main__":
    B = 2
    INPUT_DIM = 4      # output_dim must equal input_dim for the final residual add
    OUTPUT_DIM = 4
    HID1, HID2 = 32, 16

    key = jax.random.PRNGKey(0)
    kx, kp = jax.random.split(key)

    x = jax.random.normal(kx, (B, JH, INPUT_DIM), jnp.float32)
    params = make_hourglass_params(kp, INPUT_DIM, OUTPUT_DIM, HID1, HID2)
    static = build_static_matrices()

    # Lane-saturating batch chunk: target 256 lanes (v6e/v7x; use 128 on v5e).  The kron
    # weights are built per chunk, so their size is capped at (B_chunk*Cmax)^2.
    TARGET_LANES = 256
    max_c = max(INPUT_DIM, OUTPUT_DIM, HID1, HID2)
    b_chunk = max(1, min(B, TARGET_LANES // max_c))

    consts, wslab, sslab = build_kernel_operands(static, params, b_chunk)

    out = hourglass_fused(x, consts, wslab, sslab, b_chunk=b_chunk, cout=OUTPUT_DIM)
    out = jax.block_until_ready(out)

    assert out.shape == (B, JH, OUTPUT_DIM), out.shape
    assert out.dtype == jnp.float32
    assert bool(jnp.all(jnp.isfinite(out)))

    # Loose check vs. f32 gather-based reference (kernel uses bf16 MXU inputs, f32 accumulation).
    ref = jax.block_until_ready(hourglass_reference(x, params, static))
    rel_err = float(jnp.max(jnp.abs(out - ref)) / (jnp.max(jnp.abs(ref)) + 1e-6))
    assert rel_err < 0.08, f"relative error too large: {rel_err}"

    print("KERNEL_OK")
</pallas_src>

<mosaic_0001>
module attributes {stable_mosaic.version = 11 : i64} {
  func.func @_hourglass_kernel(%arg0: i32, %arg1: memref<1x136x128xf32, #tpu.memory_space<vmem>>, %arg2: memref<528x136xbf16, #tpu.memory_space<vmem>>, %arg3: memref<640x128xbf16, #tpu.memory_space<vmem>>, %arg4: memref<8x128xf32, #tpu.memory_space<vmem>>, %arg5: memref<1x136x128xf32, #tpu.memory_space<vmem>>) attributes {dimension_semantics = [#tpu.dimension_semantics<parallel>], iteration_bounds = array<i64: 1>, scalar_prefetch = 0 : i64, scratch_operands = 0 : i64, tpu.core_type = #tpu.core_type<tc>, window_params = [{transform_indices = @transform_0, window_bounds = array<i64: 1, 136, 128>}, {pipeline_mode = #tpu.pipeline_mode<synchronous>, transform_indices = @transform_1, window_bounds = array<i64: 528, 136>}, {pipeline_mode = #tpu.pipeline_mode<synchronous>, transform_indices = @transform_2, window_bounds = array<i64: 640, 128>}, {pipeline_mode = #tpu.pipeline_mode<synchronous>, transform_indices = @transform_3, window_bounds = array<i64: 8, 128>}, {transform_indices = @transform_4, window_bounds = array<i64: 1, 136, 128>}]} {
    %c0 = arith.constant 0 : index
    %c0_0 = arith.constant 0 : index
    %0 = vector.load %arg2[%c0, %c0_0] : memref<528x136xbf16, #tpu.memory_space<vmem>>, vector<136x136xbf16>
    %c136 = arith.constant 136 : index
    %c0_1 = arith.constant 0 : index
    %1 = vector.load %arg2[%c136, %c0_1] : memref<528x136xbf16, #tpu.memory_space<vmem>>, vector<72x136xbf16>
    %c208 = arith.constant 208 : index
    %c0_2 = arith.constant 0 : index
    %2 = vector.load %arg2[%c208, %c0_2] : memref<528x136xbf16, #tpu.memory_space<vmem>>, vector<40x72xbf16>
    %c248 = arith.constant 248 : index
    %c0_3 = arith.constant 0 : index
    %3 = vector.load %arg2[%c248, %c0_3] : memref<528x136xbf16, #tpu.memory_space<vmem>>, vector<72x72xbf16>
    %c320 = arith.constant 320 : index
    %c0_4 = arith.constant 0 : index
    %4 = vector.load %arg2[%c320, %c0_4] : memref<528x136xbf16, #tpu.memory_space<vmem>>, vector<72x40xbf16>
    %c392 = arith.constant 392 : index
    %c0_5 = arith.constant 0 : index
    %5 = vector.load %arg2[%c392, %c0_5] : memref<528x136xbf16, #tpu.memory_space<vmem>>, vector<136x72xbf16>
    %c0_6 = arith.constant 0 : index
    %c0_7 = arith.constant 0 : index
    %6 = vector.load %arg3[%c0_6, %c0_7] : memref<640x128xbf16, #tpu.memory_space<vmem>>, vector<128x128xbf16>
    %c128 = arith.constant 128 : index
    %c0_8 = arith.constant 0 : index
    %7 = vector.load %arg3[%c128, %c0_8] : memref<640x128xbf16, #tpu.memory_space<vmem>>, vector<128x128xbf16>
    %c256 = arith.constant 256 : index
    %c0_9 = arith.constant 0 : index
    %8 = vector.load %arg3[%c256, %c0_9] : memref<640x128xbf16, #tpu.memory_space<vmem>>, vector<128x128xbf16>
    %c384 = arith.constant 384 : index
    %c0_10 = arith.constant 0 : index
    %9 = vector.load %arg3[%c384, %c0_10] : memref<640x128xbf16, #tpu.memory_space<vmem>>, vector<128x128xbf16>
    %c512 = arith.constant 512 : index
    %c0_11 = arith.constant 0 : index
    %10 = vector.load %arg3[%c512, %c0_11] : memref<640x128xbf16, #tpu.memory_space<vmem>>, vector<128x128xbf16>
    %c0_12 = arith.constant 0 : index
    %c0_13 = arith.constant 0 : index
    %11 = vector.load %arg4[%c0_12, %c0_13] : memref<8x128xf32, #tpu.memory_space<vmem>>, vector<1x128xf32>
    %c1 = arith.constant 1 : index
    %c0_14 = arith.constant 0 : index
    %12 = vector.load %arg4[%c1, %c0_14] : memref<8x128xf32, #tpu.memory_space<vmem>>, vector<1x128xf32>
    %c2 = arith.constant 2 : index
    %c0_15 = arith.constant 0 : index
    %13 = vector.load %arg4[%c2, %c0_15] : memref<8x128xf32, #tpu.memory_space<vmem>>, vector<1x128xf32>
    %c3 = arith.constant 3 : index
    %c0_16 = arith.constant 0 : index
    %14 = vector.load %arg4[%c3, %c0_16] : memref<8x128xf32, #tpu.memory_space<vmem>>, vector<1x128xf32>
    %c4 = arith.constant 4 : index
    %c0_17 = arith.constant 0 : index
    %15 = vector.load %arg4[%c4, %c0_17] : memref<8x128xf32, #tpu.memory_space<vmem>>, vector<1x128xf32>
    %c0_18 = arith.constant 0 : index
    %c0_19 = arith.constant 0 : index
    %c0_20 = arith.constant 0 : index
    %16 = vector.load %arg1[%c0_18, %c0_19, %c0_20] : memref<1x136x128xf32, #tpu.memory_space<vmem>>, vector<1x136x128xf32>
    %17 = vector.shape_cast %16 : vector<1x136x128xf32> to vector<136x128xf32>
    %18 = arith.truncf %17 : vector<136x128xf32> to vector<136x128xbf16>
    %cst = arith.constant dense<0.000000e+00> : vector<136x128xf32>
    %19 = tpu.matmul %0, %18, %cst {dimension_numbers = #tpu.dot_dimension_numbers<[1], [0], [0], [1], [0, 0, 1, 1], [], []>} : vector<136x136xbf16>, vector<136x128xbf16>, vector<136x128xf32> -> vector<136x128xf32>
    %20 = arith.truncf %19 : vector<136x128xf32> to vector<136x128xbf16>
    %cst_21 = arith.constant dense<0.000000e+00> : vector<136x128xf32>
    %21 = tpu.matmul %20, %6, %cst_21 {dimension_numbers = #tpu.dot_dimension_numbers<[1], [0], [0], [1], [0, 0, 1, 1], [], []>} : vector<136x128xbf16>, vector<128x128xbf16>, vector<136x128xf32> -> vector<136x128xf32>
    %22 = vector.broadcast %11 : vector<1x128xf32> to vector<136x128xf32>
    %23 = arith.addf %21, %22 : vector<136x128xf32>
    %cst_22 = arith.constant 0.000000e+00 : f32
    %24 = vector.broadcast %cst_22 : f32 to vector<136x128xf32>
    %25 = arith.maximumf %23, %24 : vector<136x128xf32>
    %26 = arith.truncf %25 : vector<136x128xf32> to vector<136x128xbf16>
    %cst_23 = arith.constant dense<0.000000e+00> : vector<136x128xf32>
    %27 = tpu.matmul %26, %7, %cst_23 {dimension_numbers = #tpu.dot_dimension_numbers<[1], [0], [0], [1], [0, 0, 1, 1], [], []>} : vector<136x128xbf16>, vector<128x128xbf16>, vector<136x128xf32> -> vector<136x128xf32>
    %28 = arith.truncf %27 : vector<136x128xf32> to vector<136x128xbf16>
    %cst_24 = arith.constant dense<0.000000e+00> : vector<72x128xf32>
    %29 = tpu.matmul %1, %28, %cst_24 {dimension_numbers = #tpu.dot_dimension_numbers<[1], [0], [0], [1], [0, 0, 1, 1], [], []>} : vector<72x136xbf16>, vector<136x128xbf16>, vector<72x128xf32> -> vector<72x128xf32>
    %30 = vector.broadcast %12 : vector<1x128xf32> to vector<72x128xf32>
    %31 = arith.addf %29, %30 : vector<72x128xf32>
    %cst_25 = arith.constant 0.000000e+00 : f32
    %32 = vector.broadcast %cst_25 : f32 to vector<72x128xf32>
    %33 = arith.maximumf %31, %32 : vector<72x128xf32>
    %34 = arith.truncf %33 : vector<72x128xf32> to vector<72x128xbf16>
    %cst_26 = arith.constant dense<0.000000e+00> : vector<72x128xf32>
    %35 = tpu.matmul %34, %8, %cst_26 {dimension_numbers = #tpu.dot_dimension_numbers<[1], [0], [0], [1], [0, 0, 1, 1], [], []>} : vector<72x128xbf16>, vector<128x128xbf16>, vector<72x128xf32> -> vector<72x128xf32>
    %36 = arith.truncf %35 : vector<72x128xf32> to vector<72x128xbf16>
    %cst_27 = arith.constant dense<0.000000e+00> : vector<40x128xf32>
    %37 = tpu.matmul %2, %36, %cst_27 {dimension_numbers = #tpu.dot_dimension_numbers<[1], [0], [0], [1], [0, 0, 1, 1], [], []>} : vector<40x72xbf16>, vector<72x128xbf16>, vector<40x128xf32> -> vector<40x128xf32>
    %38 = vector.broadcast %13 : vector<1x128xf32> to vector<40x128xf32>
    %39 = arith.addf %37, %38 : vector<40x128xf32>
    %cst_28 = arith.constant 0.000000e+00 : f32
    %40 = vector.broadcast %cst_28 : f32 to vector<40x128xf32>
    %41 = arith.maximumf %39, %40 : vector<40x128xf32>
    %42 = arith.truncf %41 : vector<40x128xf32> to vector<40x128xbf16>
    %cst_29 = arith.constant dense<0.000000e+00> : vector<72x128xf32>
    %43 = tpu.matmul %4, %42, %cst_29 {dimension_numbers = #tpu.dot_dimension_numbers<[1], [0], [0], [1], [0, 0, 1, 1], [], []>} : vector<72x40xbf16>, vector<40x128xbf16>, vector<72x128xf32> -> vector<72x128xf32>
    %44 = arith.addf %43, %33 : vector<72x128xf32>
    %45 = arith.truncf %44 : vector<72x128xf32> to vector<72x128xbf16>
    %cst_30 = arith.constant dense<0.000000e+00> : vector<72x128xf32>
    %46 = tpu.matmul %3, %45, %cst_30 {dimension_numbers = #tpu.dot_dimension_numbers<[1], [0], [0], [1], [0, 0, 1, 1], [], []>} : vector<72x72xbf16>, vector<72x128xbf16>, vector<72x128xf32> -> vector<72x128xf32>
    %47 = arith.truncf %46 : vector<72x128xf32> to vector<72x128xbf16>
    %cst_31 = arith.constant dense<0.000000e+00> : vector<72x128xf32>
    %48 = tpu.matmul %47, %9, %cst_31 {dimension_numbers = #tpu.dot_dimension_numbers<[1], [0], [0], [1], [0, 0, 1, 1], [], []>} : vector<72x128xbf16>, vector<128x128xbf16>, vector<72x128xf32> -> vector<72x128xf32>
    %49 = vector.broadcast %14 : vector<1x128xf32> to vector<72x128xf32>
    %50 = arith.addf %48, %49 : vector<72x128xf32>
    %cst_32 = arith.constant 0.000000e+00 : f32
    %51 = vector.broadcast %cst_32 : f32 to vector<72x128xf32>
    %52 = arith.maximumf %50, %51 : vector<72x128xf32>
    %53 = arith.truncf %52 : vector<72x128xf32> to vector<72x128xbf16>
    %cst_33 = arith.constant dense<0.000000e+00> : vector<136x128xf32>
    %54 = tpu.matmul %5, %53, %cst_33 {dimension_numbers = #tpu.dot_dimension_numbers<[1], [0], [0], [1], [0, 0, 1, 1], [], []>} : vector<136x72xbf16>, vector<72x128xbf16>, vector<136x128xf32> -> vector<136x128xf32>
    %55 = arith.addf %54, %25 : vector<136x128xf32>
    %56 = arith.truncf %55 : vector<136x128xf32> to vector<136x128xbf16>
    %cst_34 = arith.constant dense<0.000000e+00> : vector<136x128xf32>
    %57 = tpu.matmul %56, %10, %cst_34 {dimension_numbers = #tpu.dot_dimension_numbers<[1], [0], [0], [1], [0, 0, 1, 1], [], []>} : vector<136x128xbf16>, vector<128x128xbf16>, vector<136x128xf32> -> vector<136x128xf32>
    %58 = arith.truncf %57 : vector<136x128xf32> to vector<136x128xbf16>
    %cst_35 = arith.constant dense<0.000000e+00> : vector<136x128xf32>
    %59 = tpu.matmul %0, %58, %cst_35 {dimension_numbers = #tpu.dot_dimension_numbers<[1], [0], [0], [1], [0, 0, 1, 1], [], []>} : vector<136x136xbf16>, vector<136x128xbf16>, vector<136x128xf32> -> vector<136x128xf32>
    %60 = vector.broadcast %15 : vector<1x128xf32> to vector<136x128xf32>
    %61 = arith.addf %59, %60 : vector<136x128xf32>
    %cst_36 = arith.constant 0.000000e+00 : f32
    %62 = vector.broadcast %cst_36 : f32 to vector<136x128xf32>
    %63 = arith.maximumf %61, %62 : vector<136x128xf32>
    %64 = arith.addf %63, %17 : vector<136x128xf32>
    %c0_37 = arith.constant 0 : index
    %c0_38 = arith.constant 0 : index
    %c0_39 = arith.constant 0 : index
    %65 = vector.load %arg5[%c0_37, %c0_38, %c0_39] : memref<1x136x128xf32, #tpu.memory_space<vmem>>, vector<1x136x128xf32>
    %66 = vector.shape_cast %65 : vector<1x136x128xf32> to vector<136x128xf32>
    %67 = vector.shape_cast %64 : vector<136x128xf32> to vector<1x136x128xf32>
    tpu.vector_store %arg5[%c0_37, %c0_38, %c0_39], %67 {strides = array<i32>} : memref<1x136x128xf32, #tpu.memory_space<vmem>>, vector<1x136x128xf32>,
    return
  }
  func.func @transform_0(%arg0: i32) -> (i32, i32, i32) {
    %c0_i32 = arith.constant 0 : i32
    %c0_i32_0 = arith.constant 0 : i32
    %c0_i32_1 = arith.constant 0 : i32
    return %arg0, %c0_i32, %c0_i32_0 : i32, i32, i32
  }
  func.func @transform_1(%arg0: i32) -> (i32, i32) {
    %c0_i32 = arith.constant 0 : i32
    %c0_i32_0 = arith.constant 0 : i32
    %c0_i32_1 = arith.constant 0 : i32
    return %c0_i32, %c0_i32_0 : i32, i32
  }
  func.func @transform_2(%arg0: i32) -> (i32, i32) {
    %c0_i32 = arith.constant 0 : i32
    %c0_i32_0 = arith.constant 0 : i32
    %c0_i32_1 = arith.constant 0 : i32
    return %c0_i32, %c0_i32_0 : i32, i32
  }
  func.func @transform_3(%arg0: i32) -> (i32, i32) {
    %c0_i32 = arith.constant 0 : i32
    %c0_i32_0 = arith.constant 0 : i32
    %c0_i32_1 = arith.constant 0 : i32
    return %c0_i32, %c0_i32_0 : i32, i32
  }
  func.func @transform_4(%arg0: i32) -> (i32, i32, i32) {
    %c0_i32 = arith.constant 0 : i32
    %c0_i32_0 = arith.constant 0 : i32
    %c0_i32_1 = arith.constant 0 : i32
    return %arg0, %c0_i32, %c0_i32_0 : i32, i32, i32
  }
}

</mosaic_0001>

<llo_original>
// kernel: tpu_custom_call.1
$region0: #{tpu_custom_call.1}
  #allocation0 [shape = 'u32[]', space=smem, size = 0x4, offset = 0x4, fixed_abs, tag = 'smem constant byte address 0x4 - core index']
  #allocation1 [shape = 'u32[144,128]{1,0:T(1,128)}', space=vmem, size = 0x12000, scoped, tag = 'internal scratch']
  %s0 = inlined_call_operand.vmem [shape: f32[1,136,128], index: 0, kind: input, shape index: {}]
  %s1 = inlined_call_operand.vmem [shape: bf16[528,136], index: 1, kind: input, shape index: {}]
  %s2 = inlined_call_operand.vmem [shape: bf16[640,128], index: 2, kind: input, shape index: {}]
  %s3 = inlined_call_operand.vmem [shape: f32[8,128], index: 3, kind: input, shape index: {}]
  %s4 = inlined_call_operand.hbm [shape: f32[1,136,128], index: 4, kind: output, shape index: {}]
  %s5 = sld [smem:[#allocation0]]
  $region26: #{tpu_custom_call.1} parent=0
    _
  %s7 = ssub.s32 1, %s5
  %s8 = scalar_select 0, %s7, %s5
  $region1: #{tpu_custom_call.1} parent=0
    #allocation2 [shape = 'u8[69632]{0}', space=vmem, size = 0x11000, scoped, tag = 'output window, operand 0, single buffered']
    #allocation3 [shape = 's32[1]{0}', space=sflag, size = 0x4, scoped, tag = 'scoped memory for tpu_custom_call.1']
    %9 = vsyncpa [#allocation3], 0
    // Predicated region
    $region2: #{tpu_custom_call.1} parent=1 // pred_check
      _
    $region3: #{tpu_custom_call.1} parent=1 // pred_check_branch
      %11 = sbr.rel (0) target = $region5
    $region4: #{tpu_custom_call.1} parent=1 // pred_region
      _
    $region5: #{tpu_custom_call.1} parent=1 // pred_fallthru
      _
    // Predicated region
    $region6: #{tpu_custom_call.1} parent=1 // pred_check
      _
    $region7: #{tpu_custom_call.1} parent=1 // pred_check_branch
      %13 = sbr.rel (0) target = $region9
    $region8: #{tpu_custom_call.1} parent=1 // pred_region
      _
    $region9: #{tpu_custom_call.1} parent=1 // pred_fallthru
      _
    // Predicated region
    $region10: #{tpu_custom_call.1} parent=1 // pred_check
      _
    $region11: #{tpu_custom_call.1} parent=1 // pred_check_branch
      %15 = sbr.rel (0) target = $region13
    $region12: #{tpu_custom_call.1} parent=1 // pred_region
      _
    $region13: #{tpu_custom_call.1} parent=1 // pred_fallthru
      _
    // Predicated region
    $region14: #{tpu_custom_call.1} parent=1 // pred_check
      _
    $region15: #{tpu_custom_call.1} parent=1 // pred_check_branch
      %17 = sbr.rel (0) target = $region17
    $region16: #{tpu_custom_call.1} parent=1 // pred_region
      _
    $region17: #{tpu_custom_call.1} parent=1 // pred_fallthru
      _
    %v19 = vld [vmem:[%s1] sm:$0xff]
    %v20 = vld [vmem:[%s1 + $0x8] sm:$0xff]
    %v21 = vld [vmem:[%s1 + $0x10] sm:$0xff]
    %v22 = vld [vmem:[%s1 + $0x18] sm:$0xff]
    %v23 = vld [vmem:[%s1 + $0x20] sm:$0xff]
    %v24 = vld [vmem:[%s1 + $0x28] sm:$0xff]
    %v25 = vld [vmem:[%s1 + $0x30] sm:$0xff]
    %v26 = vld [vmem:[%s1 + $0x38] sm:$0xff]
    %v27 = vld [vmem:[%s1 + $0x40] sm:$0xff]
    %v28 = vld [vmem:[%s1 + $0x48] sm:$0xff]
    %v29 = vld [vmem:[%s1 + $0x50] sm:$0xff]
    %v30 = vld [vmem:[%s1 + $0x58] sm:$0xff]
    %v31 = vld [vmem:[%s1 + $0x60] sm:$0xff]
    %v32 = vld [vmem:[%s1 + $0x68] sm:$0xff]
    %v33 = vld [vmem:[%s1 + $0x70] sm:$0xff]
    %v34 = vld [vmem:[%s1 + $0x78] sm:$0xff]
    %v35 = vld [vmem:[%s1 + $0x80] sm:$0xff]
    %v36 = vld [vmem:[%s1 + $0x88] sm:$0xff]
    %v37 = vld [vmem:[%s1 + $0x90] sm:$0xff]
    %v38 = vld [vmem:[%s1 + $0x98] sm:$0xff]
    %v39 = vld [vmem:[%s1 + $0xa0] sm:$0xff]
    %v40 = vld [vmem:[%s1 + $0xa8] sm:$0xff]
    %v41 = vld [vmem:[%s1 + $0xb0] sm:$0xff]
    %v42 = vld [vmem:[%s1 + $0xb8] sm:$0xff]
    %v43 = vld [vmem:[%s1 + $0xc0] sm:$0xff]
    %v44 = vld [vmem:[%s1 + $0xc8] sm:$0xff]
    %v45 = vld [vmem:[%s1 + $0xd0] sm:$0xf]
    %v46 = vld [vmem:[%s1 + $0xd8] sm:$0xf]
    %v47 = vld [vmem:[%s1 + $0xe0] sm:$0xf]
    %v48 = vld [vmem:[%s1 + $0xe8] sm:$0xf]
    %v49 = vld [vmem:[%s1 + $0xf0] sm:$0xf]
    %v50 = vld [vmem:[%s1 + $0xf8] sm:$0xf]
    %v51 = vld [vmem:[%s1 + $0x100] sm:$0xf]
    %v52 = vld [vmem:[%s1 + $0x108] sm:$0xf]
    %v53 = vld [vmem:[%s1 + $0x110] sm:$0xf]
    %v54 = vld [vmem:[%s1 + $0x118] sm:$0xf]
    %v55 = vld [vmem:[%s1 + $0x120] sm:$0xf]
    %v56 = vld [vmem:[%s1 + $0x128] sm:$0xf]
    %v57 = vld [vmem:[%s1 + $0x130] sm:$0xf]
    %v58 = vld [vmem:[%s1 + $0x138] sm:$0xf]
    %v59 = vld [vmem:[%s1 + $0x140] sm:$0xf]
    %v60 = vld [vmem:[%s1 + $0x148] sm:$0xf]
    %v61 = vld [vmem:[%s1 + $0x150] sm:$0xf]
    %v62 = vld [vmem:[%s1 + $0x158] sm:$0xf]
    %v63 = vld [vmem:[%s1 + $0x160] sm:$0xf]
    %v64 = vld [vmem:[%s1 + $0x168] sm:$0xf]
    %v65 = vld [vmem:[%s1 + $0x170] sm:$0xf]
    %v66 = vld [vmem:[%s1 + $0x178] sm:$0xf]
    %v67 = vld [vmem:[%s1 + $0x180] sm:$0xf]
    %v68 = vld [vmem:[%s1 + $0x188] sm:$0xf]
    %v69 = vld [vmem:[%s1 + $0x190] sm:$0xf]
    %v70 = vld [vmem:[%s1 + $0x198] sm:$0xf]
    %v71 = vld [vmem:[%s1 + $0x1a0] sm:$0xf]
    %v72 = vld [vmem:[%s1 + $0x1a8] sm:$0xf]
    %v73 = vld [vmem:[%s1 + $0x1b0] sm:$0xf]
    %v74 = vld [vmem:[%s1 + $0x1b8] sm:$0xf]
    %v75 = vld [vmem:[%s1 + $0x1c0] sm:$0xf]
    %v76 = vld [vmem:[%s1 + $0x1c8] sm:$0xf]
    %v77 = vld [vmem:[%s1 + $0x1d0] sm:$0xf]
    %v78 = vld [vmem:[%s1 + $0x1d8] sm:$0xf]
    %v79 = vld [vmem:[%s1 + $0x1e0] sm:$0xf]
    %v80 = vld [vmem:[%s1 + $0x1e8] sm:$0xf]
    %v81 = vld [vmem:[%s1 + $0x1f0] sm:$0xf]
    %v82 = vld [vmem:[%s1 + $0x1f8] sm:$0xf]
    %v83 = vld [vmem:[%s1 + $0x200] sm:$0xf]
    %v84 = vld [vmem:[%s1 + $0x208] sm:$0xf]
    %v85 = vld [vmem:[%s2] sm:$0xf]
    %v86 = vld [vmem:[%s2 + $0x4] sm:$0xf]
    %v87 = vld [vmem:[%s2 + $0x8] sm:$0xf]
    %v88 = vld [vmem:[%s2 + $0xc] sm:$0xf]
    %v89 = vld [vmem:[%s2 + $0x10] sm:$0xf]
    %v90 = vld [vmem:[%s2 + $0x14] sm:$0xf]
    %v91 = vld [vmem:[%s2 + $0x18] sm:$0xf]
    %v92 = vld [vmem:[%s2 + $0x1c] sm:$0xf]
    %v93 = vld [vmem:[%s2 + $0x20] sm:$0xf]
    %v94 = vld [vmem:[%s2 + $0x24] sm:$0xf]
    %v95 = vld [vmem:[%s2 + $0x28] sm:$0xf]
    %v96 = vld [vmem:[%s2 + $0x2c] sm:$0xf]
    %v97 = vld [vmem:[%s2 + $0x30] sm:$0xf]
    %v98 = vld [vmem:[%s2 + $0x34] sm:$0xf]
    %v99 = vld [vmem:[%s2 + $0x38] sm:$0xf]
    %v100 = vld [vmem:[%s2 + $0x3c] sm:$0xf]
    %v101 = vld [vmem:[%s2 + $0x40] sm:$0xf]
    %v102 = vld [vmem:[%s2 + $0x44] sm:$0xf]
    %v103 = vld [vmem:[%s2 + $0x48] sm:$0xf]
    %v104 = vld [vmem:[%s2 + $0x4c] sm:$0xf]
    %v105 = vld [vmem:[%s2 + $0x50] sm:$0xf]
    %v106 = vld [vmem:[%s2 + $0x54] sm:$0xf]
    %v107 = vld [vmem:[%s2 + $0x58] sm:$0xf]
    %v108 = vld [vmem:[%s2 + $0x5c] sm:$0xf]
    %v109 = vld [vmem:[%s2 + $0x60] sm:$0xf]
    %v110 = vld [vmem:[%s2 + $0x64] sm:$0xf]
    %v111 = vld [vmem:[%s2 + $0x68] sm:$0xf]
    %v112 = vld [vmem:[%s2 + $0x6c] sm:$0xf]
    %v113 = vld [vmem:[%s2 + $0x70] sm:$0xf]
    %v114 = vld [vmem:[%s2 + $0x74] sm:$0xf]
    %v115 = vld [vmem:[%s2 + $0x78] sm:$0xf]
    %v116 = vld [vmem:[%s2 + $0x7c] sm:$0xf]
    %v117 = vld [vmem:[%s2 + $0x80] sm:$0xf]
    %v118 = vld [vmem:[%s2 + $0x84] sm:$0xf]
    %v119 = vld [vmem:[%s2 + $0x88] sm:$0xf]
    %v120 = vld [vmem:[%s2 + $0x8c] sm:$0xf]
    %v121 = vld [vmem:[%s2 + $0x90] sm:$0xf]
    %v122 = vld [vmem:[%s2 + $0x94] sm:$0xf]
    %v123 = vld [vmem:[%s2 + $0x98] sm:$0xf]
    %v124 = vld [vmem:[%s2 + $0x9c] sm:$0xf]
    %v125 = vld [vmem:[%s2 + $0xa0] sm:$0xf]
    %v126 = vld [vmem:[%s2 + $0xa4] sm:$0xf]
    %v127 = vld [vmem:[%s2 + $0xa8] sm:$0xf]
    %v128 = vld [vmem:[%s2 + $0xac] sm:$0xf]
    %v129 = vld [vmem:[%s2 + $0xb0] sm:$0xf]
    %v130 = vld [vmem:[%s2 + $0xb4] sm:$0xf]
    %v131 = vld [vmem:[%s2 + $0xb8] sm:$0xf]
    %v132 = vld [vmem:[%s2 + $0xbc] sm:$0xf]
    %v133 = vld [vmem:[%s2 + $0xc0] sm:$0xf]
    %v134 = vld [vmem:[%s2 + $0xc4] sm:$0xf]
    %v135 = vld [vmem:[%s2 + $0xc8] sm:$0xf]
    %v136 = vld [vmem:[%s2 + $0xcc] sm:$0xf]
    %v137 = vld [vmem:[%s2 + $0xd0] sm:$0xf]
    %v138 = vld [vmem:[%s2 + $0xd4] sm:$0xf]
    %v139 = vld [vmem:[%s2 + $0xd8] sm:$0xf]
    %v140 = vld [vmem:[%s2 + $0xdc] sm:$0xf]
    %v141 = vld [vmem:[%s2 + $0xe0] sm:$0xf]
    %v142 = vld [vmem:[%s2 + $0xe4] sm:$0xf]
    %v143 = vld [vmem:[%s2 + $0xe8] sm:$0xf]
    %v144 = vld [vmem:[%s2 + $0xec] sm:$0xf]
    %v145 = vld [vmem:[%s2 + $0xf0] sm:$0xf]
    %v146 = vld [vmem:[%s2 + $0xf4] sm:$0xf]
    %v147 = vld [vmem:[%s2 + $0xf8] sm:$0xf]
    %v148 = vld [vmem:[%s2 + $0xfc] sm:$0xf]
    %v149 = vld [vmem:[%s2 + $0x100] sm:$0xf]
    %v150 = vld [vmem:[%s2 + $0x104] sm:$0xf]
    %v151 = vld [vmem:[%s2 + $0x108] sm:$0xf]
    %v152 = vld [vmem:[%s2 + $0x10c] sm:$0xf]
    %v153 = vld [vmem:[%s2 + $0x110] sm:$0xf]
    %v154 = vld [vmem:[%s2 + $0x114] sm:$0xf]
    %v155 = vld [vmem:[%s2 + $0x118] sm:$0xf]
    %v156 = vld [vmem:[%s2 + $0x11c] sm:$0xf]
    %v157 = vld [vmem:[%s2 + $0x120] sm:$0xf]
    %v158 = vld [vmem:[%s2 + $0x124] sm:$0xf]
    %v159 = vld [vmem:[%s2 + $0x128] sm:$0xf]
    %v160 = vld [vmem:[%s2 + $0x12c] sm:$0xf]
    %v161 = vld [vmem:[%s2 + $0x130] sm:$0xf]
    %v162 = vld [vmem:[%s2 + $0x134] sm:$0xf]
    %v163 = vld [vmem:[%s2 + $0x138] sm:$0xf]
    %v164 = vld [vmem:[%s2 + $0x13c] sm:$0xf]
    %v165 = vld [vmem:[%s3] sm:$0x1]
    %v166 = vld [vmem:[%s3 + $0x1] sm:$0x1]
    %v167 = vld [vmem:[%s3 + $0x2] sm:$0x1]
    %v168 = vld [vmem:[%s3 + $0x3] sm:$0x1]
    %v169 = vld [vmem:[%s3 + $0x4] sm:$0x1]
    %v170 = vld [vmem:[%s0] sm:$0xff]
    %v171 = vld [vmem:[%s0 + $0x8] sm:$0xff]
    %v172 = vld [vmem:[%s0 + $0x10] sm:$0xff]
    %v173 = vld [vmem:[%s0 + $0x18] sm:$0xff]
    %v174 = vld [vmem:[%s0 + $0x20] sm:$0xff]
    %v175 = vld [vmem:[%s0 + $0x28] sm:$0xff]
    %v176 = vld [vmem:[%s0 + $0x30] sm:$0xff]
    %v177 = vld [vmem:[%s0 + $0x38] sm:$0xff]
    %v178 = vld [vmem:[%s0 + $0x40] sm:$0xff]
    %v179 = vld [vmem:[%s0 + $0x48] sm:$0xff]
    %v180 = vld [vmem:[%s0 + $0x50] sm:$0xff]
    %v181 = vld [vmem:[%s0 + $0x58] sm:$0xff]
    %v182 = vld [vmem:[%s0 + $0x60] sm:$0xff]
    %v183 = vld [vmem:[%s0 + $0x68] sm:$0xff]
    %v184 = vld [vmem:[%s0 + $0x70] sm:$0xff]
    %v185 = vld [vmem:[%s0 + $0x78] sm:$0xff]
    %v186 = vld [vmem:[%s0 + $0x80] sm:$0xff]
    %v187 = vpack.c.bf16 %v171, %v170
    %v188 = vpack.c.bf16 %v173, %v172
    %v189 = vpack.c.bf16 %v175, %v174
    %v190 = vpack.c.bf16 %v177, %v176
    %v191 = vpack.c.bf16 %v179, %v178
    %v192 = vpack.c.bf16 %v181, %v180
    %v193 = vpack.c.bf16 %v183, %v182
    %v194 = vpack.c.bf16 %v185, %v184
    %v195 = vpack.c.bf16 %v186, %v186
    %v213 = vunpack.c.l.b16 %v19
    %v214 = vunpack.c.h.b16 %v19
    %v215 = vunpack.c.l.b16 %v20
    %v216 = vunpack.c.h.b16 %v20
    %v217 = vunpack.c.l.b16 %v21
    %v218 = vunpack.c.h.b16 %v21
    %v219 = vunpack.c.l.b16 %v22
    %v220 = vunpack.c.h.b16 %v22
    %v221 = vunpack.c.l.b16 %v23
    %v222 = vunpack.c.h.b16 %v23
    %v223 = vunpack.c.l.b16 %v24
    %v224 = vunpack.c.h.b16 %v24
    %v225 = vunpack.c.l.b16 %v25
    %v226 = vunpack.c.h.b16 %v25
    %v227 = vunpack.c.l.b16 %v26
    %v228 = vunpack.c.h.b16 %v26
    %v229 = vunpack.c.l.b16 %v27
    %v230 = vunpack.c.h.b16 %v27
    %v231 = vunpack.c.l.b16 %v28
    %v232 = vunpack.c.h.b16 %v28
    %v233 = vunpack.c.l.b16 %v29
    %v234 = vunpack.c.h.b16 %v29
    %v235 = vunpack.c.l.b16 %v30
    %v236 = vunpack.c.h.b16 %v30
    %v237 = vunpack.c.l.b16 %v31
    %v238 = vunpack.c.h.b16 %v31
    %v239 = vunpack.c.l.b16 %v32
    %v240 = vunpack.c.h.b16 %v32
    %v241 = vunpack.c.l.b16 %v33
    %v242 = vunpack.c.h.b16 %v33
    %v243 = vunpack.c.l.b16 %v34
    %v244 = vunpack.c.h.b16 %v34
    %v245 = vunpack.c.l.b16 %v35
    %v246 = vunpack.c.h.b16 %v35
    %v247 = vpack.c.b16 %v215, %v213
    %v248 = vpack.c.b16 %v216, %v214
    %v249 = vpack.c.b16 %v219, %v217
    %v250 = vpack.c.b16 %v220, %v218
    %v251 = vpack.c.b16 %v223, %v221
    %v252 = vpack.c.b16 %v224, %v222
    %v253 = vpack.c.b16 %v227, %v225
    %v254 = vpack.c.b16 %v228, %v226
    %v255 = vpack.c.b16 %v231, %v229
    %v256 = vpack.c.b16 %v232, %v230
    %v257 = vpack.c.b16 %v235, %v233
    %v258 = vpack.c.b16 %v236, %v234
    %v259 = vpack.c.b16 %v239, %v237
    %v260 = vpack.c.b16 %v240, %v238
    %v261 = vpack.c.b16 %v243, %v241
    %v262 = vpack.c.b16 %v244, %v242
    %v263 = vpack.c.b16 %v245, %v245
    %v264 = vpack.c.b16 %v246, %v246
    %vm274 = vcmask 64512
    %v276 = vsel %vm274, %v248, 0
    %v279 = vsel %vm274, %v250, 0
    %v282 = vsel %vm274, %v252, 0
    %v285 = vsel %vm274, %v254, 0
    %v288 = vsel %vm274, %v256, 0
    %v291 = vsel %vm274, %v258, 0
    %v294 = vsel %vm274, %v260, 0
    %v297 = vsel %vm274, %v262, 0
    %v300 = vsel %vm274, %v264, 0
    %vm302 = vcmask 1043456
    %v304 = vsel %vm302, %v195, 0
    %306 = vmatprep.subr.bf16.mxu0 0
    %307 = vmatpush1.bf16.msra.mxu0 %v187
    %308 = vmatprep.subr.bf16.mxu0 0
    %309 = vmatpush1.bf16.msra.mxu0 %v188
    %310 = vmatprep.subr.bf16.mxu0 0
    %311 = vmatpush1.bf16.msra.mxu0 %v189
    %312 = vmatprep.subr.bf16.mxu0 0
    %313 = vmatpush1.bf16.msra.mxu0 %v190
    %314 = vmatprep.subr.bf16.mxu0 0
    %315 = vmatpush1.bf16.msra.mxu0 %v191
    %316 = vmatprep.subr.bf16.mxu0 0
    %317 = vmatpush1.bf16.msra.mxu0 %v192
    %318 = vmatprep.subr.bf16.mxu0 0
    %319 = vmatpush1.bf16.msra.mxu0 %v193
    %320 = vmatprep.subr.bf16.mxu0 0
    %321 = vmatpush1.bf16.msra.mxu0 %v194
    %322 = vmatprep.subr.bf16.mxu0 0
    %323 = vmatpush1.bf16.msra.mxu0 %v304
    %324 = vmatprep.subr.bf16.mxu0 0
    %325 = vmatpush1.bf16.msra.mxu0 0
    %326 = vmatprep.subr.bf16.mxu0 0
    %327 = vmatpush1.bf16.msra.mxu0 0
    %328 = vmatprep.subr.bf16.mxu0 0
    %329 = vmatpush1.bf16.msra.mxu0 0
    %330 = vmatprep.subr.bf16.mxu0 0
    %331 = vmatpush1.bf16.msra.mxu0 0
    %332 = vmatprep.subr.bf16.mxu0 0
    %333 = vmatpush1.bf16.msra.mxu0 0
    %334 = vmatprep.subr.bf16.mxu0 0
    %335 = vmatpush1.bf16.msra.mxu0 0
    %336 = vmatprep.subr.bf16.mxu0 0
    %337 = vmatpush1.bf16.msra.mxu0 0
    %338 = vmatprep.mubr.bf16.mxu0 %v276
    %339 = vmatmul.mubr.bf16.gmra.mrb[0].mxu0 %v247
    %v340 = vpop.f32.mrb[0].mxu0
    %v341 = vadd.f32 0.0, %v340
    %v342 = vpop.f32.mrb[0].mxu0
    %v343 = vpop.f32.mrb[0].mxu0
    %v344 = vadd.f32 0.0, %v343
    %v345 = vpop.f32.mrb[0].mxu0
    %346 = vmatprep.mubr.bf16.mxu0 %v279
    %347 = vmatmul.mubr.bf16.gmra.mrb[0].mxu0 %v249
    %v348 = vpop.f32.mrb[0].mxu0
    %v349 = vadd.f32 0.0, %v348
    %v350 = vpop.f32.mrb[0].mxu0
    %v351 = vpop.f32.mrb[0].mxu0
    %v352 = vadd.f32 0.0, %v351
    %v353 = vpop.f32.mrb[0].mxu0
    %354 = vmatprep.mubr.bf16.mxu0 %v282
    %355 = vmatmul.mubr.bf16.gmra.mrb[0].mxu0 %v251
    %v356 = vpop.f32.mrb[0].mxu0
    %v357 = vadd.f32 0.0, %v356
    %v358 = vpop.f32.mrb[0].mxu0
    %v359 = vpop.f32.mrb[0].mxu0
    %v360 = vadd.f32 0.0, %v359
    %v361 = vpop.f32.mrb[0].mxu0
    %362 = vmatprep.mubr.bf16.mxu0 %v285
    %363 = vmatmul.mubr.bf16.gmra.mrb[0].mxu0 %v253
    %v364 = vpop.f32.mrb[0].mxu0
    %v365 = vadd.f32 0.0, %v364
    %v366 = vpop.f32.mrb[0].mxu0
    %v367 = vpop.f32.mrb[0].mxu0
    %v368 = vadd.f32 0.0, %v367
    %v369 = vpop.f32.mrb[0].mxu0
    %370 = vmatprep.mubr.bf16.mxu0 %v288
    %371 = vmatmul.mubr.bf16.gmra.mrb[0].mxu0 %v255
    %v372 = vpop.f32.mrb[0].mxu0
    %v373 = vadd.f32 0.0, %v372
    %v374 = vpop.f32.mrb[0].mxu0
    %v375 = vpop.f32.mrb[0].mxu0
    %v376 = vadd.f32 0.0, %v375
    %v377 = vpop.f32.mrb[0].mxu0
    %378 = vmatprep.mubr.bf16.mxu0 %v291
    %379 = vmatmul.mubr.bf16.gmra.mrb[0].mxu0 %v257
    %v380 = vpop.f32.mrb[0].mxu0
    %v381 = vadd.f32 0.0, %v380
    %v382 = vpop.f32.mrb[0].mxu0
    %v383 = vpop.f32.mrb[0].mxu0
    %v384 = vadd.f32 0.0, %v383
    %v385 = vpop.f32.mrb[0].mxu0
    %386 = vmatprep.mubr.bf16.mxu0 %v294
    %387 = vmatmul.mubr.bf16.gmra.mrb[0].mxu0 %v259
    %v388 = vpop.f32.mrb[0].mxu0
    %v389 = vadd.f32 0.0, %v388
    %v390 = vpop.f32.mrb[0].mxu0
    %v391 = vpop.f32.mrb[0].mxu0
    %v392 = vadd.f32 0.0, %v391
    %v393 = vpop.f32.mrb[0].mxu0
    %394 = vmatprep.mubr.bf16.mxu0 %v297
    %395 = vmatmul.mubr.bf16.gmra.mrb[0].mxu0 %v261
    %v396 = vpop.f32.mrb[0].mxu0
    %v397 = vadd.f32 0.0, %v396
    %v398 = vpop.f32.mrb[0].mxu0
    %v399 = vpop.f32.mrb[0].mxu0
    %v400 = vadd.f32 0.0, %v399
    %v401 = vpop.f32.mrb[0].mxu0
    %402 = vmatprep.mubr.bf16.mxu0 %v300
    %403 = vmatmul.mubr.bf16.gmra.mrb[0].mxu0 %v263
    %v404 = vpop.f32.mrb[0].mxu0
    %v405 = vadd.f32 0.0, %v404
    %v406 = vpop.f32.mrb[0].mxu0
    %v407 = vpop.f32.mrb[0].mxu0
    %v408 = vpop.f32.mrb[0].mxu0
    %409 = vdwg.mxu0
    %v410 = vpack.c.bf16 %v344, %v341
    %v411 = vpack.c.bf16 %v352, %v349
    %v412 = vpack.c.bf16 %v360, %v357
    %v413 = vpack.c.bf16 %v368, %v365
    %v414 = vpack.c.bf16 %v376, %v373
    %v415 = vpack.c.bf16 %v384, %v381
    %v416 = vpack.c.bf16 %v392, %v389
    %v417 = vpack.c.bf16 %v400, %v397
    %v418 = vpack.c.bf16 %v405, %v405
    %v419 = vlaneseq
    %v420 = vshrl.u32 %v419, 7
    %v421 = vsub.s32 0, %v420
    %v422 = vrot.slane %v165, %v421
    %v439 = vunpack.c.l.b16 %v85
    %v440 = vunpack.c.l.b16 %v86
    %v441 = vunpack.c.l.b16 %v87
    %v442 = vunpack.c.l.b16 %v88
    %v443 = vunpack.c.l.b16 %v89
    %v444 = vunpack.c.l.b16 %v90
    %v445 = vunpack.c.l.b16 %v91
    %v446 = vunpack.c.l.b16 %v92
    %v447 = vunpack.c.l.b16 %v93
    %v448 = vunpack.c.l.b16 %v94
    %v449 = vunpack.c.l.b16 %v95
    %v450 = vunpack.c.l.b16 %v96
    %v451 = vunpack.c.l.b16 %v97
    %v452 = vunpack.c.l.b16 %v98
    %v453 = vunpack.c.l.b16 %v99
    %v454 = vunpack.c.l.b16 %v100
    %v455 = vpack.c.b16 %v440, %v439
    %v456 = vpack.c.b16 %v442, %v441
    %v457 = vpack.c.b16 %v444, %v443
    %v458 = vpack.c.b16 %v446, %v445
    %v459 = vpack.c.b16 %v448, %v447
    %v460 = vpack.c.b16 %v450, %v449
    %v461 = vpack.c.b16 %v452, %v451
    %v462 = vpack.c.b16 %v454, %v453
    %471 = vmatprep.subr.bf16.mxu0 0
    %472 = vmatpush1.bf16.msra.mxu0 %v455
    %473 = vmatprep.subr.bf16.mxu0 0
    %474 = vmatpush1.bf16.msra.mxu0 %v456
    %475 = vmatprep.subr.bf16.mxu0 0
    %476 = vmatpush1.bf16.msra.mxu0 %v457
    %477 = vmatprep.subr.bf16.mxu0 0
    %478 = vmatpush1.bf16.msra.mxu0 %v458
    %479 = vmatprep.subr.bf16.mxu0 0
    %480 = vmatpush1.bf16.msra.mxu0 %v459
    %481 = vmatprep.subr.bf16.mxu0 0
    %482 = vmatpush1.bf16.msra.mxu0 %v460
    %483 = vmatprep.subr.bf16.mxu0 0
    %484 = vmatpush1.bf16.msra.mxu0 %v461
    %485 = vmatprep.subr.bf16.mxu0 0
    %486 = vmatpush1.bf16.msra.mxu0 %v462
    %487 = vmatprep.subr.bf16.mxu0 0
    %488 = vmatpush1.bf16.msra.mxu0 0
    %489 = vmatprep.subr.bf16.mxu0 0
    %490 = vmatpush1.bf16.msra.mxu0 0
    %491 = vmatprep.subr.bf16.mxu0 0
    %492 = vmatpush1.bf16.msra.mxu0 0
    %493 = vmatprep.subr.bf16.mxu0 0
    %494 = vmatpush1.bf16.msra.mxu0 0
    %495 = vmatprep.subr.bf16.mxu0 0
    %496 = vmatpush1.bf16.msra.mxu0 0
    %497 = vmatprep.subr.bf16.mxu0 0
    %498 = vmatpush1.bf16.msra.mxu0 0
    %499 = vmatprep.subr.bf16.mxu0 0
    %500 = vmatpush1.bf16.msra.mxu0 0
    %501 = vmatprep.subr.bf16.mxu0 0
    %502 = vmatpush1.bf16.msra.mxu0 0
    %503 = vmatprep.mubr.bf16.mxu0 0
    %504 = vmatmul.mubr.bf16.gmra.mrb[0].mxu0 %v410
    %v505 = vpop.f32.mrb[0].mxu0
    %v506 = vadd.f32 %v422, %v505
    %v507 = vpop.f32.mrb[0].mxu0
    %v508 = vpop.f32.mrb[0].mxu0
    %v509 = vadd.f32 %v422, %v508
    %v510 = vpop.f32.mrb[0].mxu0
    %511 = vmatprep.mubr.bf16.mxu0 0
    %512 = vmatmul.mubr.bf16.gmra.mrb[0].mxu0 %v411
    %v513 = vpop.f32.mrb[0].mxu0
    %v514 = vadd.f32 %v422, %v513
    %v515 = vpop.f32.mrb[0].mxu0
    %v516 = vpop.f32.mrb[0].mxu0
    %v517 = vadd.f32 %v422, %v516
    %v518 = vpop.f32.mrb[0].mxu0
    %519 = vmatprep.mubr.bf16.mxu0 0
    %520 = vmatmul.mubr.bf16.gmra.mrb[0].mxu0 %v412
    %v521 = vpop.f32.mrb[0].mxu0
    %v522 = vadd.f32 %v422, %v521
    %v523 = vpop.f32.mrb[0].mxu0
    %v524 = vpop.f32.mrb[0].mxu0
    %v525 = vadd.f32 %v422, %v524
    %v526 = vpop.f32.mrb[0].mxu0
    %527 = vmatprep.mubr.bf16.mxu0 0
    %528 = vmatmul.mubr.bf16.gmra.mrb[0].mxu0 %v413
    %v529 = vpop.f32.mrb[0].mxu0
    %v530 = vadd.f32 %v422, %v529
    %v531 = vpop.f32.mrb[0].mxu0
    %v532 = vpop.f32.mrb[0].mxu0
    %v533 = vadd.f32 %v422, %v532
    %v534 = vpop.f32.mrb[0].mxu0
    %535 = vmatprep.mubr.bf16.mxu0 0
    %536 = vmatmul.mubr.bf16.gmra.mrb[0].mxu0 %v414
    %v537 = vpop.f32.mrb[0].mxu0
    %v538 = vadd.f32 %v422, %v537
    %v539 = vpop.f32.mrb[0].mxu0
    %v540 = vpop.f32.mrb[0].mxu0
    %v541 = vadd.f32 %v422, %v540
    %v542 = vpop.f32.mrb[0].mxu0
    %543 = vmatprep.mubr.bf16.mxu0 0
    %544 = vmatmul.mubr.bf16.gmra.mrb[0].mxu0 %v415
    %v545 = vpop.f32.mrb[0].mxu0
    %v546 = vadd.f32 %v422, %v545
    %v547 = vpop.f32.mrb[0].mxu0
    %v548 = vpop.f32.mrb[0].mxu0
    %v549 = vadd.f32 %v422, %v548
    %v550 = vpop.f32.mrb[0].mxu0
    %551 = vmatprep.mubr.bf16.mxu0 0
    %552 = vmatmul.mubr.bf16.gmra.mrb[0].mxu0 %v416
    %v553 = vpop.f32.mrb[0].mxu0
    %v554 = vadd.f32 %v422, %v553
    %v555 = vpop.f32.mrb[0].mxu0
    %v556 = vpop.f32.mrb[0].mxu0
    %v557 = vadd.f32 %v422, %v556
    %v558 = vpop.f32.mrb[0].mxu0
    %559 = vmatprep.mubr.bf16.mxu0 0
    %560 = vmatmul.mubr.bf16.gmra.mrb[0].mxu0 %v417
    %v561 = vpop.f32.mrb[0].mxu0
    %v562 = vadd.f32 %v422, %v561
    %v563 = vpop.f32.mrb[0].mxu0
    %v564 = vpop.f32.mrb[0].mxu0
    %v565 = vadd.f32 %v422, %v564
    %v566 = vpop.f32.mrb[0].mxu0
    %567 = vmatprep.mubr.bf16.mxu0 0
    %568 = vmatmul.mubr.bf16.gmra.mrb[0].mxu0 %v418
    %v569 = vpop.f32.mrb[0].mxu0
    %v570 = vadd.f32 %v422, %v569
    %v571 = vpop.f32.mrb[0].mxu0
    %v572 = vpop.f32.mrb[0].mxu0
    %v573 = vpop.f32.mrb[0].mxu0
    %574 = vdwg.mxu0
    %v575 = vmax.f32 %v506, 0.0
    %v576 = vmax.f32 %v509, 0.0
    %v577 = vmax.f32 %v514, 0.0
    %v578 = vmax.f32 %v517, 0.0
    %v579 = vmax.f32 %v522, 0.0
    %v580 = vmax.f32 %v525, 0.0
    %v581 = vmax.f32 %v530, 0.0
    %v582 = vmax.f32 %v533, 0.0
    %v583 = vmax.f32 %v538, 0.0
    %v584 = vmax.f32 %v541, 0.0
    %v585 = vmax.f32 %v546, 0.0
    %v586 = vmax.f32 %v549, 0.0
    %v587 = vmax.f32 %v554, 0.0
    %v588 = vmax.f32 %v557, 0.0
    %v589 = vmax.f32 %v562, 0.0
    %v590 = vmax.f32 %v565, 0.0
    %v591 = vmax.f32 %v570, 0.0
    %v592 = vpack.c.bf16 %v576, %v575
    %v593 = vpack.c.bf16 %v578, %v577
    %v594 = vpack.c.bf16 %v580, %v579
    %v595 = vpack.c.bf16 %v582, %v581
    %v596 = vpack.c.bf16 %v584, %v583
    %v597 = vpack.c.bf16 %v586, %v585
    %v598 = vpack.c.bf16 %v588, %v587
    %v599 = vpack.c.bf16 %v590, %v589
    %v600 = vpack.c.bf16 %v591, %v591
    %v617 = vunpack.c.l.b16 %v101
    %v618 = vunpack.c.l.b16 %v102
    %v619 = vunpack.c.l.b16 %v103
    %v620 = vunpack.c.l.b16 %v104
    %v621 = vunpack.c.l.b16 %v105
    %v622 = vunpack.c.l.b16 %v106
    %v623 = vunpack.c.l.b16 %v107
    %v624 = vunpack.c.l.b16 %v108
    %v625 = vunpack.c.l.b16 %v109
    %v626 = vunpack.c.l.b16 %v110
    %v627 = vunpack.c.l.b16 %v111
    %v628 = vunpack.c.l.b16 %v112
    %v629 = vunpack.c.l.b16 %v113
    %v630 = vunpack.c.l.b16 %v114
    %v631 = vunpack.c.l.b16 %v115
    %v632 = vunpack.c.l.b16 %v116
    %v633 = vpack.c.b16 %v618, %v617
    %v634 = vpack.c.b16 %v620, %v619
    %v635 = vpack.c.b16 %v622, %v621
    %v636 = vpack.c.b16 %v624, %v623
    %v637 = vpack.c.b16 %v626, %v625
    %v638 = vpack.c.b16 %v628, %v627
    %v639 = vpack.c.b16 %v630, %v629
    %v640 = vpack.c.b16 %v632, %v631
    %649 = vmatprep.subr.bf16.mxu0 0
    %650 = vmatpush1.bf16.msra.mxu0 %v633
    %651 = vmatprep.subr.bf16.mxu0 0
    %652 = vmatpush1.bf16.msra.mxu0 %v634
    %653 = vmatprep.subr.bf16.mxu0 0
    %654 = vmatpush1.bf16.msra.mxu0 %v635
    %655 = vmatprep.subr.bf16.mxu0 0
    %656 = vmatpush1.bf16.msra.mxu0 %v636
    %657 = vmatprep.subr.bf16.mxu0 0
    %658 = vmatpush1.bf16.msra.mxu0 %v637
    %659 = vmatprep.subr.bf16.mxu0 0
    %660 = vmatpush1.bf16.msra.mxu0 %v638
    %661 = vmatprep.subr.bf16.mxu0 0
    %662 = vmatpush1.bf16.msra.mxu0 %v639
    %663 = vmatprep.subr.bf16.mxu0 0
    %664 = vmatpush1.bf16.msra.mxu0 %v640
    %665 = vmatprep.subr.bf16.mxu0 0
    %666 = vmatpush1.bf16.msra.mxu0 0
    %667 = vmatprep.subr.bf16.mxu0 0
    %668 = vmatpush1.bf16.msra.mxu0 0
    %669 = vmatprep.subr.bf16.mxu0 0
    %670 = vmatpush1.bf16.msra.mxu0 0
    %671 = vmatprep.subr.bf16.mxu0 0
    %672 = vmatpush1.bf16.msra.mxu0 0
    %673 = vmatprep.subr.bf16.mxu0 0
    %674 = vmatpush1.bf16.msra.mxu0 0
    %675 = vmatprep.subr.bf16.mxu0 0
    %676 = vmatpush1.bf16.msra.mxu0 0
    %677 = vmatprep.subr.bf16.mxu0 0
    %678 = vmatpush1.bf16.msra.mxu0 0
    %679 = vmatprep.subr.bf16.mxu0 0
    %680 = vmatpush1.bf16.msra.mxu0 0
    %681 = vmatprep.mubr.bf16.mxu0 0
    %682 = vmatmul.mubr.bf16.gmra.mrb[0].mxu0 %v592
    %v683 = vpop.f32.mrb[0].mxu0
    %v684 = vadd.f32 0.0, %v683
    %v685 = vpop.f32.mrb[0].mxu0
    %v686 = vpop.f32.mrb[0].mxu0
    %v687 = vadd.f32 0.0, %v686
    %v688 = vpop.f32.mrb[0].mxu0
    %689 = vmatprep.mubr.bf16.mxu0 0
    %690 = vmatmul.mubr.bf16.gmra.mrb[0].mxu0 %v593
    %v691 = vpop.f32.mrb[0].mxu0
    %v692 = vadd.f32 0.0, %v691
    %v693 = vpop.f32.mrb[0].mxu0
    %v694 = vpop.f32.mrb[0].mxu0
    %v695 = vadd.f32 0.0, %v694
    %v696 = vpop.f32.mrb[0].mxu0
    %697 = vmatprep.mubr.bf16.mxu0 0
    %698 = vmatmul.mubr.bf16.gmra.mrb[0].mxu0 %v594
    %v699 = vpop.f32.mrb[0].mxu0
    %v700 = vadd.f32 0.0, %v699
    %v701 = vpop.f32.mrb[0].mxu0
    %v702 = vpop.f32.mrb[0].mxu0
    %v703 = vadd.f32 0.0, %v702
    %v704 = vpop.f32.mrb[0].mxu0
    %705 = vmatprep.mubr.bf16.mxu0 0
    %706 = vmatmul.mubr.bf16.gmra.mrb[0].mxu0 %v595
    %v707 = vpop.f32.mrb[0].mxu0
    %v708 = vadd.f32 0.0, %v707
    %v709 = vpop.f32.mrb[0].mxu0
    %v710 = vpop.f32.mrb[0].mxu0
    %v711 = vadd.f32 0.0, %v710
    %v712 = vpop.f32.mrb[0].mxu0
    %713 = vmatprep.mubr.bf16.mxu0 0
    %714 = vmatmul.mubr.bf16.gmra.mrb[0].mxu0 %v596
    %v715 = vpop.f32.mrb[0].mxu0
    %v716 = vadd.f32 0.0, %v715
    %v717 = vpop.f32.mrb[0].mxu0
    %v718 = vpop.f32.mrb[0].mxu0
    %v719 = vadd.f32 0.0, %v718
    %v720 = vpop.f32.mrb[0].mxu0
    %721 = vmatprep.mubr.bf16.mxu0 0
    %722 = vmatmul.mubr.bf16.gmra.mrb[0].mxu0 %v597
    %v723 = vpop.f32.mrb[0].mxu0
    %v724 = vadd.f32 0.0, %v723
    %v725 = vpop.f32.mrb[0].mxu0
    %v726 = vpop.f32.mrb[0].mxu0
    %v727 = vadd.f32 0.0, %v726
    %v728 = vpop.f32.mrb[0].mxu0
    %729 = vmatprep.mubr.bf16.mxu0 0
    %730 = vmatmul.mubr.bf16.gmra.mrb[0].mxu0 %v598
    %v731 = vpop.f32.mrb[0].mxu0
    %v732 = vadd.f32 0.0, %v731
    %v733 = vpop.f32.mrb[0].mxu0
    %v734 = vpop.f32.mrb[0].mxu0
    %v735 = vadd.f32 0.0, %v734
    %v736 = vpop.f32.mrb[0].mxu0
    %737 = vmatprep.mubr.bf16.mxu0 0
    %738 = vmatmul.mubr.bf16.gmra.mrb[0].mxu0 %v599
    %v739 = vpop.f32.mrb[0].mxu0
    %v740 = vadd.f32 0.0, %v739
    %v741 = vpop.f32.mrb[0].mxu0
    %v742 = vpop.f32.mrb[0].mxu0
    %v743 = vadd.f32 0.0, %v742
    %v744 = vpop.f32.mrb[0].mxu0
    %745 = vmatprep.mubr.bf16.mxu0 0
    %746 = vmatmul.mubr.bf16.gmra.mrb[0].mxu0 %v600
    %v747 = vpop.f32.mrb[0].mxu0
    %v748 = vadd.f32 0.0, %v747
    %v749 = vpop.f32.mrb[0].mxu0
    %v750 = vpop.f32.mrb[0].mxu0
    %v751 = vpop.f32.mrb[0].mxu0
    %752 = vdwg.mxu0
    %v753 = vpack.c.bf16 %v687, %v684
    %v754 = vpack.c.bf16 %v695, %v692
    %v755 = vpack.c.bf16 %v703, %v700
    %v756 = vpack.c.bf16 %v711, %v708
    %v757 = vpack.c.bf16 %v719, %v716
    %v758 = vpack.c.bf16 %v727, %v724
    %v759 = vpack.c.bf16 %v735, %v732
    %v760 = vpack.c.bf16 %v743, %v740
    %v761 = vpack.c.bf16 %v748, %v748
    %v762 = vlaneseq
    %v763 = vshrl.u32 %v762, 7
    %v764 = vsub.s32 0, %v763
    %v765 = vrot.slane %v166, %v764
    %v775 = vunpack.c.l.b16 %v36
    %v776 = vunpack.c.h.b16 %v36
    %v777 = vunpack.c.l.b16 %v37
    %v778 = vunpack.c.h.b16 %v37
    %v779 = vunpack.c.l.b16 %v38
    %v780 = vunpack.c.h.b16 %v38
    %v781 = vunpack.c.l.b16 %v39
    %v782 = vunpack.c.h.b16 %v39
    %v783 = vunpack.c.l.b16 %v40
    %v784 = vunpack.c.h.b16 %v40
    %v785 = vunpack.c.l.b16 %v41
    %v786 = vunpack.c.h.b16 %v41
    %v787 = vunpack.c.l.b16 %v42
    %v788 = vunpack.c.h.b16 %v42
    %v789 = vunpack.c.l.b16 %v43
    %v790 = vunpack.c.h.b16 %v43
    %v791 = vunpack.c.l.b16 %v44
    %v792 = vunpack.c.h.b16 %v44
    %v793 = vpack.c.b16 %v777, %v775
    %v794 = vpack.c.b16 %v778, %v776
    %v795 = vpack.c.b16 %v781, %v779
    %v796 = vpack.c.b16 %v782, %v780
    %v797 = vpack.c.b16 %v785, %v783
    %v798 = vpack.c.b16 %v786, %v784
    %v799 = vpack.c.b16 %v789, %v787
    %v800 = vpack.c.b16 %v790, %v788
    %v801 = vpack.c.b16 %v791, %v791
    %v802 = vpack.c.b16 %v792, %v792
    %v809 = vsel %vm274, %v794, 0
    %v812 = vsel %vm274, %v796, 0
    %v815 = vsel %vm274, %v798, 0
    %v818 = vsel %vm274, %v800, 0
    %v821 = vsel %vm274, %v802, 0
    %v824 = vsel %vm302, %v761, 0
    %826 = vmatprep.subr.bf16.mxu0 0
    %827 = vmatpush1.bf16.msra.mxu0 %v753
    %828 = vmatprep.subr.bf16.mxu0 0
    %829 = vmatpush1.bf16.msra.mxu0 %v754
    %830 = vmatprep.subr.bf16.mxu0 0
    %831 = vmatpush1.bf16.msra.mxu0 %v755
    %832 = vmatprep.subr.bf16.mxu0 0
    %833 = vmatpush1.bf16.msra.mxu0 %v756
    %834 = vmatprep.subr.bf16.mxu0 0
    %835 = vmatpush1.bf16.msra.mxu0 %v757
    %836 = vmatprep.subr.bf16.mxu0 0
    %837 = vmatpush1.bf16.msra.mxu0 %v758
    %838 = vmatprep.subr.bf16.mxu0 0
    %839 = vmatpush1.bf16.msra.mxu0 %v759
    %840 = vmatprep.subr.bf16.mxu0 0
    %841 = vmatpush1.bf16.msra.mxu0 %v760
    %842 = vmatprep.subr.bf16.mxu0 0
    %843 = vmatpush1.bf16.msra.mxu0 %v824
    %844 = vmatprep.subr.bf16.mxu0 0
    %845 = vmatpush1.bf16.msra.mxu0 0
    %846 = vmatprep.subr.bf16.mxu0 0
    %847 = vmatpush1.bf16.msra.mxu0 0
    %848 = vmatprep.subr.bf16.mxu0 0
    %849 = vmatpush1.bf16.msra.mxu0 0
    %850 = vmatprep.subr.bf16.mxu0 0
    %851 = vmatpush1.bf16.msra.mxu0 0
    %852 = vmatprep.subr.bf16.mxu0 0
    %853 = vmatpush1.bf16.msra.mxu0 0
    %854 = vmatprep.subr.bf16.mxu0 0
    %855 = vmatpush1.bf16.msra.mxu0 0
    %856 = vmatprep.subr.bf16.mxu0 0
    %857 = vmatpush1.bf16.msra.mxu0 0
    %858 = vmatprep.mubr.bf16.mxu0 %v809
    %859 = vmatmul.mubr.bf16.gmra.mrb[0].mxu0 %v793
    %v860 = vpop.f32.mrb[0].mxu0
    %v861 = vadd.f32 %v765, %v860
    %v862 = vpop.f32.mrb[0].mxu0
    %v863 = vpop.f32.mrb[0].mxu0
    %v864 = vadd.f32 %v765, %v863
    %v865 = vpop.f32.mrb[0].mxu0
    %866 = vmatprep.mubr.bf16.mxu0 %v812
    %867 = vmatmul.mubr.bf16.gmra.mrb[0].mxu0 %v795
    %v868 = vpop.f32.mrb[0].mxu0
    %v869 = vadd.f32 %v765, %v868
    %v870 = vpop.f32.mrb[0].mxu0
    %v871 = vpop.f32.mrb[0].mxu0
    %v872 = vadd.f32 %v765, %v871
    %v873 = vpop.f32.mrb[0].mxu0
    %874 = vmatprep.mubr.bf16.mxu0 %v815
    %875 = vmatmul.mubr.bf16.gmra.mrb[0].mxu0 %v797
    %v876 = vpop.f32.mrb[0].mxu0
    %v877 = vadd.f32 %v765, %v876
    %v878 = vpop.f32.mrb[0].mxu0
    %v879 = vpop.f32.mrb[0].mxu0
    %v880 = vadd.f32 %v765, %v879
    %v881 = vpop.f32.mrb[0].mxu0
    %882 = vmatprep.mubr.bf16.mxu0 %v818
    %883 = vmatmul.mubr.bf16.gmra.mrb[0].mxu0 %v799
    %v884 = vpop.f32.mrb[0].mxu0
    %v885 = vadd.f32 %v765, %v884
    %v886 = vpop.f32.mrb[0].mxu0
    %v887 = vpop.f32.mrb[0].mxu0
    %v888 = vadd.f32 %v765, %v887
    %v889 = vpop.f32.mrb[0].mxu0
    %890 = vmatprep.mubr.bf16.mxu0 %v821
    %891 = vmatmul.mubr.bf16.gmra.mrb[0].mxu0 %v801
    %v892 = vpop.f32.mrb[0].mxu0
    %v893 = vadd.f32 %v765, %v892
    %v894 = vpop.f32.mrb[0].mxu0
    %v895 = vpop.f32.mrb[0].mxu0
    %v896 = vpop.f32.mrb[0].mxu0
    %897 = vdwg.mxu0
    %v898 = vmax.f32 %v861, 0.0
    %v899 = vmax.f32 %v864, 0.0
    %v900 = vmax.f32 %v869, 0.0
    %v901 = vmax.f32 %v872, 0.0
    %v902 = vmax.f32 %v877, 0.0
    %v903 = vmax.f32 %v880, 0.0
    %v904 = vmax.f32 %v885, 0.0
    %v905 = vmax.f32 %v888, 0.0
    %v906 = vmax.f32 %v893, 0.0
    %v907 = vpack.c.bf16 %v899, %v898
    %v908 = vpack.c.bf16 %v901, %v900
    %v909 = vpack.c.bf16 %v903, %v902
    %v910 = vpack.c.bf16 %v905, %v904
    %v911 = vpack.c.bf16 %v906, %v906
    %v928 = vunpack.c.l.b16 %v117
    %v929 = vunpack.c.l.b16 %v118
    %v930 = vunpack.c.l.b16 %v119
    %v931 = vunpack.c.l.b16 %v120
    %v932 = vunpack.c.l.b16 %v121
    %v933 = vunpack.c.l.b16 %v122
    %v934 = vunpack.c.l.b16 %v123
    %v935 = vunpack.c.l.b16 %v124
    %v936 = vunpack.c.l.b16 %v125
    %v937 = vunpack.c.l.b16 %v126
    %v938 = vunpack.c.l.b16 %v127
    %v939 = vunpack.c.l.b16 %v128
    %v940 = vunpack.c.l.b16 %v129
    %v941 = vunpack.c.l.b16 %v130
    %v942 = vunpack.c.l.b16 %v131
    %v943 = vunpack.c.l.b16 %v132
    %v944 = vpack.c.b16 %v929, %v928
    %v945 = vpack.c.b16 %v931, %v930
    %v946 = vpack.c.b16 %v933, %v932
    %v947 = vpack.c.b16 %v935, %v934
    %v948 = vpack.c.b16 %v937, %v936
    %v949 = vpack.c.b16 %v939, %v938
    %v950 = vpack.c.b16 %v941, %v940
    %v951 = vpack.c.b16 %v943, %v942
    %960 = vmatprep.subr.bf16.mxu0 0
    %961 = vmatpush1.bf16.msra.mxu0 %v944
    %962 = vmatprep.subr.bf16.mxu0 0
    %963 = vmatpush1.bf16.msra.mxu0 %v945
    %964 = vmatprep.subr.bf16.mxu0 0
    %965 = vmatpush1.bf16.msra.mxu0 %v946
    %966 = vmatprep.subr.bf16.mxu0 0
    %967 = vmatpush1.bf16.msra.mxu0 %v947
    %968 = vmatprep.subr.bf16.mxu0 0
    %969 = vmatpush1.bf16.msra.mxu0 %v948
    %970 = vmatprep.subr.bf16.mxu0 0
    %971 = vmatpush1.bf16.msra.mxu0 %v949
    %972 = vmatprep.subr.bf16.mxu0 0
    %973 = vmatpush1.bf16.msra.mxu0 %v950
    %974 = vmatprep.subr.bf16.mxu0 0
    %975 = vmatpush1.bf16.msra.mxu0 %v951
    %976 = vmatprep.subr.bf16.mxu0 0
    %977 = vmatpush1.bf16.msra.mxu0 0
    %978 = vmatprep.subr.bf16.mxu0 0
    %979 = vmatpush1.bf16.msra.mxu0 0
    %980 = vmatprep.subr.bf16.mxu0 0
    %981 = vmatpush1.bf16.msra.mxu0 0
    %982 = vmatprep.subr.bf16.mxu0 0
    %983 = vmatpush1.bf16.msra.mxu0 0
    %984 = vmatprep.subr.bf16.mxu0 0
    %985 = vmatpush1.bf16.msra.mxu0 0
    %986 = vmatprep.subr.bf16.mxu0 0
    %987 = vmatpush1.bf16.msra.mxu0 0
    %988 = vmatprep.subr.bf16.mxu0 0
    %989 = vmatpush1.bf16.msra.mxu0 0
    %990 = vmatprep.subr.bf16.mxu0 0
    %991 = vmatpush1.bf16.msra.mxu0 0
    %992 = vmatprep.mubr.bf16.mxu0 0
    %993 = vmatmul.mubr.bf16.gmra.mrb[0].mxu0 %v907
    %v994 = vpop.f32.mrb[0].mxu0
    %v995 = vadd.f32 0.0, %v994
    %v996 = vpop.f32.mrb[0].mxu0
    %v997 = vpop.f32.mrb[0].mxu0
    %v998 = vadd.f32 0.0, %v997
    %v999 = vpop.f32.mrb[0].mxu0
    %1000 = vmatprep.mubr.bf16.mxu0 0
    %1001 = vmatmul.mubr.bf16.gmra.mrb[0].mxu0 %v908
    %v1002 = vpop.f32.mrb[0].mxu0
    %v1003 = vadd.f32 0.0, %v1002
    %v1004 = vpop.f32.mrb[0].mxu0
    %v1005 = vpop.f32.mrb[0].mxu0
    %v1006 = vadd.f32 0.0, %v1005
    %v1007 = vpop.f32.mrb[0].mxu0
    %1008 = vmatprep.mubr.bf16.mxu0 0
    %1009 = vmatmul.mubr.bf16.gmra.mrb[0].mxu0 %v909
    %v1010 = vpop.f32.mrb[0].mxu0
    %v1011 = vadd.f32 0.0, %v1010
    %v1012 = vpop.f32.mrb[0].mxu0
    %v1013 = vpop.f32.mrb[0].mxu0
    %v1014 = vadd.f32 0.0, %v1013
    %v1015 = vpop.f32.mrb[0].mxu0
    %1016 = vmatprep.mubr.bf16.mxu0 0
    %1017 = vmatmul.mubr.bf16.gmra.mrb[0].mxu0 %v910
    %v1018 = vpop.f32.mrb[0].mxu0
    %v1019 = vadd.f32 0.0, %v1018
    %v1020 = vpop.f32.mrb[0].mxu0
    %v1021 = vpop.f32.mrb[0].mxu0
    %v1022 = vadd.f32 0.0, %v1021
    %v1023 = vpop.f32.mrb[0].mxu0
    %1024 = vmatprep.mubr.bf16.mxu0 0
    %1025 = vmatmul.mubr.bf16.gmra.mrb[0].mxu0 %v911
    %v1026 = vpop.f32.mrb[0].mxu0
    %v1027 = vadd.f32 0.0, %v1026
    %v1028 = vpop.f32.mrb[0].mxu0
    %v1029 = vpop.f32.mrb[0].mxu0
    %v1030 = vpop.f32.mrb[0].mxu0
    %1031 = vdwg.mxu0
    %v1032 = vpack.c.bf16 %v998, %v995
    %v1033 = vpack.c.bf16 %v1006, %v1003
    %v1034 = vpack.c.bf16 %v1014, %v1011
    %v1035 = vpack.c.bf16 %v1022, %v1019
    %v1036 = vpack.c.bf16 %v1027, %v1027
    %v1037 = vlaneseq
    %v1038 = vshrl.u32 %v1037, 7
    %v1039 = vsub.s32 0, %v1038
    %v1040 = vrot.slane %v167, %v1039
    %v1046 = vunpack.c.l.b16 %v45
    %v1047 = vunpack.c.l.b16 %v46
    %v1048 = vunpack.c.l.b16 %v47
    %v1049 = vunpack.c.l.b16 %v48
    %v1050 = vunpack.c.l.b16 %v49
    %v1051 = vpack.c.b16 %v1047, %v1046
    %v1052 = vpack.c.b16 %v1049, %v1048
    %v1053 = vpack.c.b16 %v1050, %v1050
    %vm1054 = vcmask 588800
    %v1056 = vsel %vm1054, %v1051, 0
    %v1059 = vsel %vm1054, %v1052, 0
    %v1062 = vsel %vm1054, %v1053, 0
    %v1065 = vsel %vm302, %v1036, 0
    %1067 = vmatprep.subr.bf16.mxu0 0
    %1068 = vmatpush1.bf16.msra.mxu0 %v1032
    %1069 = vmatprep.subr.bf16.mxu0 0
    %1070 = vmatpush1.bf16.msra.mxu0 %v1033
    %1071 = vmatprep.subr.bf16.mxu0 0
    %1072 = vmatpush1.bf16.msra.mxu0 %v1034
    %1073 = vmatprep.subr.bf16.mxu0 0
    %1074 = vmatpush1.bf16.msra.mxu0 %v1035
    %1075 = vmatprep.subr.bf16.mxu0 0
    %1076 = vmatpush1.bf16.msra.mxu0 %v1065
    %1077 = vmatprep.subr.bf16.mxu0 0
    %1078 = vmatpush1.bf16.msra.mxu0 0
    %1079 = vmatprep.subr.bf16.mxu0 0
    %1080 = vmatpush1.bf16.msra.mxu0 0
    %1081 = vmatprep.subr.bf16.mxu0 0
    %1082 = vmatpush1.bf16.msra.mxu0 0
    %1083 = vmatprep.subr.bf16.mxu0 0
    %1084 = vmatpush1.bf16.msra.mxu0 0
    %1085 = vmatprep.subr.bf16.mxu0 0
    %1086 = vmatpush1.bf16.msra.mxu0 0
    %1087 = vmatprep.subr.bf16.mxu0 0
    %1088 = vmatpush1.bf16.msra.mxu0 0
    %1089 = vmatprep.subr.bf16.mxu0 0
    %1090 = vmatpush1.bf16.msra.mxu0 0
    %1091 = vmatprep.subr.bf16.mxu0 0
    %1092 = vmatpush1.bf16.msra.mxu0 0
    %1093 = vmatprep.subr.bf16.mxu0 0
    %1094 = vmatpush1.bf16.msra.mxu0 0
    %1095 = vmatprep.subr.bf16.mxu0 0
    %1096 = vmatpush1.bf16.msra.mxu0 0
    %1097 = vmatprep.subr.bf16.mxu0 0
    %1098 = vmatpush1.bf16.msra.mxu0 0
    %1099 = vmatprep.mubr.bf16.mxu0 0
    %1100 = vmatmul.mubr.bf16.gmra.mrb[0].mxu0 %v1056
    %v1101 = vpop.f32.mrb[0].mxu0
    %v1102 = vadd.f32 %v1040, %v1101
    %v1103 = vpop.f32.mrb[0].mxu0
    %v1104 = vpop.f32.mrb[0].mxu0
    %v1105 = vadd.f32 %v1040, %v1104
    %v1106 = vpop.f32.mrb[0].mxu0
    %1107 = vmatprep.mubr.bf16.mxu0 0
    %1108 = vmatmul.mubr.bf16.gmra.mrb[0].mxu0 %v1059
    %v1109 = vpop.f32.mrb[0].mxu0
    %v1110 = vadd.f32 %v1040, %v1109
    %v1111 = vpop.f32.mrb[0].mxu0
    %v1112 = vpop.f32.mrb[0].mxu0
    %v1113 = vadd.f32 %v1040, %v1112
    %v1114 = vpop.f32.mrb[0].mxu0
    %1115 = vmatprep.mubr.bf16.mxu0 0
    %1116 = vmatmul.mubr.bf16.gmra.mrb[0].mxu0 %v1062
    %v1117 = vpop.f32.mrb[0].mxu0
    %v1118 = vadd.f32 %v1040, %v1117
    %v1119 = vpop.f32.mrb[0].mxu0
    %v1120 = vpop.f32.mrb[0].mxu0
    %v1121 = vpop.f32.mrb[0].mxu0
    %1122 = vdwg.mxu0
    %v1123 = vmax.f32 %v1102, 0.0
    %v1124 = vmax.f32 %v1105, 0.0
    %v1125 = vmax.f32 %v1110, 0.0
    %v1126 = vmax.f32 %v1113, 0.0
    %v1127 = vmax.f32 %v1118, 0.0
    %v1128 = vpack.c.bf16 %v1124, %v1123
    %v1129 = vpack.c.bf16 %v1126, %v1125
    %v1130 = vpack.c.bf16 %v1127, %v1127
    %v1140 = vunpack.c.l.b16 %v59
    %v1141 = vunpack.c.l.b16 %v60
    %v1142 = vunpack.c.l.b16 %v61
    %v1143 = vunpack.c.l.b16 %v62
    %v1144 = vunpack.c.l.b16 %v63
    %v1145 = vunpack.c.l.b16 %v64
    %v1146 = vunpack.c.l.b16 %v65
    %v1147 = vunpack.c.l.b16 %v66
    %v1148 = vunpack.c.l.b16 %v67
    %v1149 = vpack.c.b16 %v1141, %v1140
    %v1150 = vpack.c.b16 %v1143, %v1142
    %v1151 = vpack.c.b16 %v1145, %v1144
    %v1152 = vpack.c.b16 %v1147, %v1146
    %v1153 = vpack.c.b16 %v1148, %v1148
    %vm1154 = vcmask 326656
    %v1156 = vsel %vm1154, %v1149, 0
    %v1159 = vsel %vm1154, %v1150, 0
    %v1162 = vsel %vm1154, %v1151, 0
    %v1165 = vsel %vm1154, %v1152, 0
    %v1168 = vsel %vm1154, %v1153, 0
    %v1171 = vsel %vm302, %v1130, 0
    %1173 = vmatprep.subr.bf16.mxu0 0
    %1174 = vmatpush1.bf16.msra.mxu0 %v1128
    %1175 = vmatprep.subr.bf16.mxu0 0
    %1176 = vmatpush1.bf16.msra.mxu0 %v1129
    %1177 = vmatprep.subr.bf16.mxu0 0
    %1178 = vmatpush1.bf16.msra.mxu0 %v1171
    %1179 = vmatprep.subr.bf16.mxu0 0
    %1180 = vmatpush1.bf16.msra.mxu0 0
    %1181 = vmatprep.subr.bf16.mxu0 0
    %1182 = vmatpush1.bf16.msra.mxu0 0
    %1183 = vmatprep.subr.bf16.mxu0 0
    %1184 = vmatpush1.bf16.msra.mxu0 0
    %1185 = vmatprep.subr.bf16.mxu0 0
    %1186 = vmatpush1.bf16.msra.mxu0 0
    %1187 = vmatprep.subr.bf16.mxu0 0
    %1188 = vmatpush1.bf16.msra.mxu0 0
    %1189 = vmatprep.subr.bf16.mxu0 0
    %1190 = vmatpush1.bf16.msra.mxu0 0
    %1191 = vmatprep.subr.bf16.mxu0 0
    %1192 = vmatpush1.bf16.msra.mxu0 0
    %1193 = vmatprep.subr.bf16.mxu0 0
    %1194 = vmatpush1.bf16.msra.mxu0 0
    %1195 = vmatprep.subr.bf16.mxu0 0
    %1196 = vmatpush1.bf16.msra.mxu0 0
    %1197 = vmatprep.subr.bf16.mxu0 0
    %1198 = vmatpush1.bf16.msra.mxu0 0
    %1199 = vmatprep.subr.bf16.mxu0 0
    %1200 = vmatpush1.bf16.msra.mxu0 0
    %1201 = vmatprep.subr.bf16.mxu0 0
    %1202 = vmatpush1.bf16.msra.mxu0 0
    %1203 = vmatprep.subr.bf16.mxu0 0
    %1204 = vmatpush1.bf16.msra.mxu0 0
    %1205 = vmatprep.mubr.bf16.mxu0 0
    %1206 = vmatmul.mubr.bf16.gmra.mrb[0].mxu0 %v1156
    %v1207 = vpop.f32.mrb[0].mxu0
    %v1208 = vadd.f32 %v898, %v1207
    %v1209 = vpop.f32.mrb[0].mxu0
    %v1210 = vpop.f32.mrb[0].mxu0
    %v1211 = vadd.f32 %v899, %v1210
    %v1212 = vpop.f32.mrb[0].mxu0
    %1213 = vmatprep.mubr.bf16.mxu0 0
    %1214 = vmatmul.mubr.bf16.gmra.mrb[0].mxu0 %v1159
    %v1215 = vpop.f32.mrb[0].mxu0
    %v1216 = vadd.f32 %v900, %v1215
    %v1217 = vpop.f32.mrb[0].mxu0
    %v1218 = vpop.f32.mrb[0].mxu0
    %v1219 = vadd.f32 %v901, %v1218
    %v1220 = vpop.f32.mrb[0].mxu0
    %1221 = vmatprep.mubr.bf16.mxu0 0
    %1222 = vmatmul.mubr.bf16.gmra.mrb[0].mxu0 %v1162
    %v1223 = vpop.f32.mrb[0].mxu0
    %v1224 = vadd.f32 %v902, %v1223
    %v1225 = vpop.f32.mrb[0].mxu0
    %v1226 = vpop.f32.mrb[0].mxu0
    %v1227 = vadd.f32 %v903, %v1226
    %v1228 = vpop.f32.mrb[0].mxu0
    %1229 = vmatprep.mubr.bf16.mxu0 0
    %1230 = vmatmul.mubr.bf16.gmra.mrb[0].mxu0 %v1165
    %v1231 = vpop.f32.mrb[0].mxu0
    %v1232 = vadd.f32 %v904, %v1231
    %v1233 = vpop.f32.mrb[0].mxu0
    %v1234 = vpop.f32.mrb[0].mxu0
    %v1235 = vadd.f32 %v905, %v1234
    %v1236 = vpop.f32.mrb[0].mxu0
    %1237 = vmatprep.mubr.bf16.mxu0 0
    %1238 = vmatmul.mubr.bf16.gmra.mrb[0].mxu0 %v1168
    %v1239 = vpop.f32.mrb[0].mxu0
    %v1240 = vadd.f32 %v906, %v1239
    %v1241 = vpop.f32.mrb[0].mxu0
    %v1242 = vpop.f32.mrb[0].mxu0
    %v1243 = vpop.f32.mrb[0].mxu0
    %1244 = vdwg.mxu0
    %v1245 = vpack.c.bf16 %v1211, %v1208
    %v1246 = vpack.c.bf16 %v1219, %v1216
    %v1247 = vpack.c.bf16 %v1227, %v1224
    %v1248 = vpack.c.bf16 %v1235, %v1232
    %v1249 = vpack.c.bf16 %v1240, %v1240
    %v1259 = vunpack.c.l.b16 %v50
    %v1260 = vunpack.c.l.b16 %v51
    %v1261 = vunpack.c.l.b16 %v52
    %v1262 = vunpack.c.l.b16 %v53
    %v1263 = vunpack.c.l.b16 %v54
    %v1264 = vunpack.c.l.b16 %v55
    %v1265 = vunpack.c.l.b16 %v56
    %v1266 = vunpack.c.l.b16 %v57
    %v1267 = vunpack.c.l.b16 %v58
    %v1268 = vpack.c.b16 %v1260, %v1259
    %v1269 = vpack.c.b16 %v1262, %v1261
    %v1270 = vpack.c.b16 %v1264, %v1263
    %v1271 = vpack.c.b16 %v1266, %v1265
    %v1272 = vpack.c.b16 %v1267, %v1267
    %v1274 = vsel %vm1054, %v1268, 0
    %v1277 = vsel %vm1054, %v1269, 0
    %v1280 = vsel %vm1054, %v1270, 0
    %v1283 = vsel %vm1054, %v1271, 0
    %v1286 = vsel %vm1054, %v1272, 0
    %v1289 = vsel %vm302, %v1249, 0
    %1291 = vmatprep.subr.bf16.mxu0 0
    %1292 = vmatpush1.bf16.msra.mxu0 %v1245
    %1293 = vmatprep.subr.bf16.mxu0 0
    %1294 = vmatpush1.bf16.msra.mxu0 %v1246
    %1295 = vmatprep.subr.bf16.mxu0 0
    %1296 = vmatpush1.bf16.msra.mxu0 %v1247
    %1297 = vmatprep.subr.bf16.mxu0 0
    %1298 = vmatpush1.bf16.msra.mxu0 %v1248
    %1299 = vmatprep.subr.bf16.mxu0 0
    %1300 = vmatpush1.bf16.msra.mxu0 %v1289
    %1301 = vmatprep.subr.bf16.mxu0 0
    %1302 = vmatpush1.bf16.msra.mxu0 0
    %1303 = vmatprep.subr.bf16.mxu0 0
    %1304 = vmatpush1.bf16.msra.mxu0 0
    %1305 = vmatprep.subr.bf16.mxu0 0
    %1306 = vmatpush1.bf16.msra.mxu0 0
    %1307 = vmatprep.subr.bf16.mxu0 0
    %1308 = vmatpush1.bf16.msra.mxu0 0
    %1309 = vmatprep.subr.bf16.mxu0 0
    %1310 = vmatpush1.bf16.msra.mxu0 0
    %1311 = vmatprep.subr.bf16.mxu0 0
    %1312 = vmatpush1.bf16.msra.mxu0 0
    %1313 = vmatprep.subr.bf16.mxu0 0
    %1314 = vmatpush1.bf16.msra.mxu0 0
    %1315 = vmatprep.subr.bf16.mxu0 0
    %1316 = vmatpush1.bf16.msra.mxu0 0
    %1317 = vmatprep.subr.bf16.mxu0 0
    %1318 = vmatpush1.bf16.msra.mxu0 0
    %1319 = vmatprep.subr.bf16.mxu0 0
    %1320 = vmatpush1.bf16.msra.mxu0 0
    %1321 = vmatprep.subr.bf16.mxu0 0
    %1322 = vmatpush1.bf16.msra.mxu0 0
    %1323 = vmatprep.mubr.bf16.mxu0 0
    %1324 = vmatmul.mubr.bf16.gmra.mrb[0].mxu0 %v1274
    %v1325 = vpop.f32.mrb[0].mxu0
    %v1326 = vadd.f32 0.0, %v1325
    %v1327 = vpop.f32.mrb[0].mxu0
    %v1328 = vpop.f32.mrb[0].mxu0
    %v1329 = vadd.f32 0.0, %v1328
    %v1330 = vpop.f32.mrb[0].mxu0
    %1331 = vmatprep.mubr.bf16.mxu0 0
    %1332 = vmatmul.mubr.bf16.gmra.mrb[0].mxu0 %v1277
    %v1333 = vpop.f32.mrb[0].mxu0
    %v1334 = vadd.f32 0.0, %v1333
    %v1335 = vpop.f32.mrb[0].mxu0
    %v1336 = vpop.f32.mrb[0].mxu0
    %v1337 = vadd.f32 0.0, %v1336
    %v1338 = vpop.f32.mrb[0].mxu0
    %1339 = vmatprep.mubr.bf16.mxu0 0
    %1340 = vmatmul.mubr.bf16.gmra.mrb[0].mxu0 %v1280
    %v1341 = vpop.f32.mrb[0].mxu0
    %v1342 = vadd.f32 0.0, %v1341
    %v1343 = vpop.f32.mrb[0].mxu0
    %v1344 = vpop.f32.mrb[0].mxu0
    %v1345 = vadd.f32 0.0, %v1344
    %v1346 = vpop.f32.mrb[0].mxu0
    %1347 = vmatprep.mubr.bf16.mxu0 0
    %1348 = vmatmul.mubr.bf16.gmra.mrb[0].mxu0 %v1283
    %v1349 = vpop.f32.mrb[0].mxu0
    %v1350 = vadd.f32 0.0, %v1349
    %v1351 = vpop.f32.mrb[0].mxu0
    %v1352 = vpop.f32.mrb[0].mxu0
    %v1353 = vadd.f32 0.0, %v1352
    %v1354 = vpop.f32.mrb[0].mxu0
    %1355 = vmatprep.mubr.bf16.mxu0 0
    %1356 = vmatmul.mubr.bf16.gmra.mrb[0].mxu0 %v1286
    %v1357 = vpop.f32.mrb[0].mxu0
    %v1358 = vadd.f32 0.0, %v1357
    %v1359 = vpop.f32.mrb[0].mxu0
    %v1360 = vpop.f32.mrb[0].mxu0
    %v1361 = vpop.f32.mrb[0].mxu0
    %1362 = vdwg.mxu0
    %v1363 = vpack.c.bf16 %v1329, %v1326
    %v1364 = vpack.c.bf16 %v1337, %v1334
    %v1365 = vpack.c.bf16 %v1345, %v1342
    %v1366 = vpack.c.bf16 %v1353, %v1350
    %v1367 = vpack.c.bf16 %v1358, %v1358
    %v1368 = vlaneseq
    %v1369 = vshrl.u32 %v1368, 7
    %v1370 = vsub.s32 0, %v1369
    %v1371 = vrot.slane %v168, %v1370
    %v1388 = vunpack.c.l.b16 %v133
    %v1389 = vunpack.c.l.b16 %v134
    %v1390 = vunpack.c.l.b16 %v135
    %v1391 = vunpack.c.l.b16 %v136
    %v1392 = vunpack.c.l.b16 %v137
    %v1393 = vunpack.c.l.b16 %v138
    %v1394 = vunpack.c.l.b16 %v139
    %v1395 = vunpack.c.l.b16 %v140
    %v1396 = vunpack.c.l.b16 %v141
    %v1397 = vunpack.c.l.b16 %v142
    %v1398 = vunpack.c.l.b16 %v143
    %v1399 = vunpack.c.l.b16 %v144
    %v1400 = vunpack.c.l.b16 %v145
    %v1401 = vunpack.c.l.b16 %v146
    %v1402 = vunpack.c.l.b16 %v147
    %v1403 = vunpack.c.l.b16 %v148
    %v1404 = vpack.c.b16 %v1389, %v1388
    %v1405 = vpack.c.b16 %v1391, %v1390
    %v1406 = vpack.c.b16 %v1393, %v1392
    %v1407 = vpack.c.b16 %v1395, %v1394
    %v1408 = vpack.c.b16 %v1397, %v1396
    %v1409 = vpack.c.b16 %v1399, %v1398
    %v1410 = vpack.c.b16 %v1401, %v1400
    %v1411 = vpack.c.b16 %v1403, %v1402
    %1420 = vmatprep.subr.bf16.mxu0 0
    %1421 = vmatpush1.bf16.msra.mxu0 %v1404
    %1422 = vmatprep.subr.bf16.mxu0 0
    %1423 = vmatpush1.bf16.msra.mxu0 %v1405
    %1424 = vmatprep.subr.bf16.mxu0 0
    %1425 = vmatpush1.bf16.msra.mxu0 %v1406
    %1426 = vmatprep.subr.bf16.mxu0 0
    %1427 = vmatpush1.bf16.msra.mxu0 %v1407
    %1428 = vmatprep.subr.bf16.mxu0 0
    %1429 = vmatpush1.bf16.msra.mxu0 %v1408
    %1430 = vmatprep.subr.bf16.mxu0 0
    %1431 = vmatpush1.bf16.msra.mxu0 %v1409
    %1432 = vmatprep.subr.bf16.mxu0 0
    %1433 = vmatpush1.bf16.msra.mxu0 %v1410
    %1434 = vmatprep.subr.bf16.mxu0 0
    %1435 = vmatpush1.bf16.msra.mxu0 %v1411
    %1436 = vmatprep.subr.bf16.mxu0 0
    %1437 = vmatpush1.bf16.msra.mxu0 0
    %1438 = vmatprep.subr.bf16.mxu0 0
    %1439 = vmatpush1.bf16.msra.mxu0 0
    %1440 = vmatprep.subr.bf16.mxu0 0
    %1441 = vmatpush1.bf16.msra.mxu0 0
    %1442 = vmatprep.subr.bf16.mxu0 0
    %1443 = vmatpush1.bf16.msra.mxu0 0
    %1444 = vmatprep.subr.bf16.mxu0 0
    %1445 = vmatpush1.bf16.msra.mxu0 0
    %1446 = vmatprep.subr.bf16.mxu0 0
    %1447 = vmatpush1.bf16.msra.mxu0 0
    %1448 = vmatprep.subr.bf16.mxu0 0
    %1449 = vmatpush1.bf16.msra.mxu0 0
    %1450 = vmatprep.subr.bf16.mxu0 0
    %1451 = vmatpush1.bf16.msra.mxu0 0
    %1452 = vmatprep.mubr.bf16.mxu0 0
    %1453 = vmatmul.mubr.bf16.gmra.mrb[0].mxu0 %v1363
    %v1454 = vpop.f32.mrb[0].mxu0
    %v1455 = vadd.f32 %v1371, %v1454
    %v1456 = vpop.f32.mrb[0].mxu0
    %v1457 = vpop.f32.mrb[0].mxu0
    %v1458 = vadd.f32 %v1371, %v1457
    %v1459 = vpop.f32.mrb[0].mxu0
    %1460 = vmatprep.mubr.bf16.mxu0 0
    %1461 = vmatmul.mubr.bf16.gmra.mrb[0].mxu0 %v1364
    %v1462 = vpop.f32.mrb[0].mxu0
    %v1463 = vadd.f32 %v1371, %v1462
    %v1464 = vpop.f32.mrb[0].mxu0
    %v1465 = vpop.f32.mrb[0].mxu0
    %v1466 = vadd.f32 %v1371, %v1465
    %v1467 = vpop.f32.mrb[0].mxu0
    %1468 = vmatprep.mubr.bf16.mxu0 0
    %1469 = vmatmul.mubr.bf16.gmra.mrb[0].mxu0 %v1365
    %v1470 = vpop.f32.mrb[0].mxu0
    %v1471 = vadd.f32 %v1371, %v1470
    %v1472 = vpop.f32.mrb[0].mxu0
    %v1473 = vpop.f32.mrb[0].mxu0
    %v1474 = vadd.f32 %v1371, %v1473
    %v1475 = vpop.f32.mrb[0].mxu0
    %1476 = vmatprep.mubr.bf16.mxu0 0
    %1477 = vmatmul.mubr.bf16.gmra.mrb[0].mxu0 %v1366
    %v1478 = vpop.f32.mrb[0].mxu0
    %v1479 = vadd.f32 %v1371, %v1478
    %v1480 = vpop.f32.mrb[0].mxu0
    %v1481 = vpop.f32.mrb[0].mxu0
    %v1482 = vadd.f32 %v1371, %v1481
    %v1483 = vpop.f32.mrb[0].mxu0
    %1484 = vmatprep.mubr.bf16.mxu0 0
    %1485 = vmatmul.mubr.bf16.gmra.mrb[0].mxu0 %v1367
    %v1486 = vpop.f32.mrb[0].mxu0
    %v1487 = vadd.f32 %v1371, %v1486
    %v1488 = vpop.f32.mrb[0].mxu0
    %v1489 = vpop.f32.mrb[0].mxu0
    %v1490 = vpop.f32.mrb[0].mxu0
    %1491 = vdwg.mxu0
    %v1492 = vmax.f32 %v1455, 0.0
    %v1493 = vmax.f32 %v1458, 0.0
    %v1494 = vmax.f32 %v1463, 0.0
    %v1495 = vmax.f32 %v1466, 0.0
    %v1496 = vmax.f32 %v1471, 0.0
    %v1497 = vmax.f32 %v1474, 0.0
    %v1498 = vmax.f32 %v1479, 0.0
    %v1499 = vmax.f32 %v1482, 0.0
    %v1500 = vmax.f32 %v1487, 0.0
    %v1501 = vpack.c.bf16 %v1493, %v1492
    %v1502 = vpack.c.bf16 %v1495, %v1494
    %v1503 = vpack.c.bf16 %v1497, %v1496
    %v1504 = vpack.c.bf16 %v1499, %v1498
    %v1505 = vpack.c.bf16 %v1500, %v1500
    %v1523 = vunpack.c.l.b16 %v68
    %v1524 = vunpack.c.l.b16 %v69
    %v1525 = vunpack.c.l.b16 %v70
    %v1526 = vunpack.c.l.b16 %v71
    %v1527 = vunpack.c.l.b16 %v72
    %v1528 = vunpack.c.l.b16 %v73
    %v1529 = vunpack.c.l.b16 %v74
    %v1530 = vunpack.c.l.b16 %v75
    %v1531 = vunpack.c.l.b16 %v76
    %v1532 = vunpack.c.l.b16 %v77
    %v1533 = vunpack.c.l.b16 %v78
    %v1534 = vunpack.c.l.b16 %v79
    %v1535 = vunpack.c.l.b16 %v80
    %v1536 = vunpack.c.l.b16 %v81
    %v1537 = vunpack.c.l.b16 %v82
    %v1538 = vunpack.c.l.b16 %v83
    %v1539 = vunpack.c.l.b16 %v84
    %v1540 = vpack.c.b16 %v1524, %v1523
    %v1541 = vpack.c.b16 %v1526, %v1525
    %v1542 = vpack.c.b16 %v1528, %v1527
    %v1543 = vpack.c.b16 %v1530, %v1529
    %v1544 = vpack.c.b16 %v1532, %v1531
    %v1545 = vpack.c.b16 %v1534, %v1533
    %v1546 = vpack.c.b16 %v1536, %v1535
    %v1547 = vpack.c.b16 %v1538, %v1537
    %v1548 = vpack.c.b16 %v1539, %v1539
    %v1550 = vsel %vm1054, %v1540, 0
    %v1553 = vsel %vm1054, %v1541, 0
    %v1556 = vsel %vm1054, %v1542, 0
    %v1559 = vsel %vm1054, %v1543, 0
    %v1562 = vsel %vm1054, %v1544, 0
    %v1565 = vsel %vm1054, %v1545, 0
    %v1568 = vsel %vm1054, %v1546, 0
    %v1571 = vsel %vm1054, %v1547, 0
    %v1574 = vsel %vm1054, %v1548, 0
    %v1577 = vsel %vm302, %v1505, 0
    %1579 = vmatprep.subr.bf16.mxu0 0
    %1580 = vmatpush1.bf16.msra.mxu0 %v1501
    %1581 = vmatprep.subr.bf16.mxu0 0
    %1582 = vmatpush1.bf16.msra.mxu0 %v1502
    %1583 = vmatprep.subr.bf16.mxu0 0
    %1584 = vmatpush1.bf16.msra.mxu0 %v1503
    %1585 = vmatprep.subr.bf16.mxu0 0
    %1586 = vmatpush1.bf16.msra.mxu0 %v1504
    %1587 = vmatprep.subr.bf16.mxu0 0
    %1588 = vmatpush1.bf16.msra.mxu0 %v1577
    %1589 = vmatprep.subr.bf16.mxu0 0
    %1590 = vmatpush1.bf16.msra.mxu0 0
    %1591 = vmatprep.subr.bf16.mxu0 0
    %1592 = vmatpush1.bf16.msra.mxu0 0
    %1593 = vmatprep.subr.bf16.mxu0 0
    %1594 = vmatpush1.bf16.msra.mxu0 0
    %1595 = vmatprep.subr.bf16.mxu0 0
    %1596 = vmatpush1.bf16.msra.mxu0 0
    %1597 = vmatprep.subr.bf16.mxu0 0
    %1598 = vmatpush1.bf16.msra.mxu0 0
    %1599 = vmatprep.subr.bf16.mxu0 0
    %1600 = vmatpush1.bf16.msra.mxu0 0
    %1601 = vmatprep.subr.bf16.mxu0 0
    %1602 = vmatpush1.bf16.msra.mxu0 0
    %1603 = vmatprep.subr.bf16.mxu0 0
    %1604 = vmatpush1.bf16.msra.mxu0 0
    %1605 = vmatprep.subr.bf16.mxu0 0
    %1606 = vmatpush1.bf16.msra.mxu0 0
    %1607 = vmatprep.subr.bf16.mxu0 0
    %1608 = vmatpush1.bf16.msra.mxu0 0
    %1609 = vmatprep.subr.bf16.mxu0 0
    %1610 = vmatpush1.bf16.msra.mxu0 0
    %1611 = vmatprep.mubr.bf16.mxu0 0
    %1612 = vmatmul.mubr.bf16.gmra.mrb[0].mxu0 %v1550
    %v1613 = vpop.f32.mrb[0].mxu0
    %v1614 = vadd.f32 %v575, %v1613
    %v1615 = vpop.f32.mrb[0].mxu0
    %v1616 = vpop.f32.mrb[0].mxu0
    %v1617 = vadd.f32 %v576, %v1616
    %v1618 = vpop.f32.mrb[0].mxu0
    %1619 = vmatprep.mubr.bf16.mxu0 0
    %1620 = vmatmul.mubr.bf16.gmra.mrb[0].mxu0 %v1553
    %v1621 = vpop.f32.mrb[0].mxu0
    %v1622 = vadd.f32 %v577, %v1621
    %v1623 = vpop.f32.mrb[0].mxu0
    %v1624 = vpop.f32.mrb[0].mxu0
    %v1625 = vadd.f32 %v578, %v1624
    %v1626 = vpop.f32.mrb[0].mxu0
    %1627 = vmatprep.mubr.bf16.mxu0 0
    %1628 = vmatmul.mubr.bf16.gmra.mrb[0].mxu0 %v1556
    %v1629 = vpop.f32.mrb[0].mxu0
    %v1630 = vadd.f32 %v579, %v1629
    %v1631 = vpop.f32.mrb[0].mxu0
    %v1632 = vpop.f32.mrb[0].mxu0
    %v1633 = vadd.f32 %v580, %v1632
    %v1634 = vpop.f32.mrb[0].mxu0
    %1635 = vmatprep.mubr.bf16.mxu0 0
    %1636 = vmatmul.mubr.bf16.gmra.mrb[0].mxu0 %v1559
    %v1637 = vpop.f32.mrb[0].mxu0
    %v1638 = vadd.f32 %v581, %v1637
    %v1639 = vpop.f32.mrb[0].mxu0
    %v1640 = vpop.f32.mrb[0].mxu0
    %v1641 = vadd.f32 %v582, %v1640
    %v1642 = vpop.f32.mrb[0].mxu0
    %1643 = vmatprep.mubr.bf16.mxu0 0
    %1644 = vmatmul.mubr.bf16.gmra.mrb[0].mxu0 %v1562
    %v1645 = vpop.f32.mrb[0].mxu0
    %v1646 = vadd.f32 %v583, %v1645
    %v1647 = vpop.f32.mrb[0].mxu0
    %v1648 = vpop.f32.mrb[0].mxu0
    %v1649 = vadd.f32 %v584, %v1648
    %v1650 = vpop.f32.mrb[0].mxu0
    %1651 = vmatprep.mubr.bf16.mxu0 0
    %1652 = vmatmul.mubr.bf16.gmra.mrb[0].mxu0 %v1565
    %v1653 = vpop.f32.mrb[0].mxu0
    %v1654 = vadd.f32 %v585, %v1653
    %v1655 = vpop.f32.mrb[0].mxu0
    %v1656 = vpop.f32.mrb[0].mxu0
    %v1657 = vadd.f32 %v586, %v1656
    %v1658 = vpop.f32.mrb[0].mxu0
    %1659 = vmatprep.mubr.bf16.mxu0 0
    %1660 = vmatmul.mubr.bf16.gmra.mrb[0].mxu0 %v1568
    %v1661 = vpop.f32.mrb[0].mxu0
    %v1662 = vadd.f32 %v587, %v1661
    %v1663 = vpop.f32.mrb[0].mxu0
    %v1664 = vpop.f32.mrb[0].mxu0
    %v1665 = vadd.f32 %v588, %v1664
    %v1666 = vpop.f32.mrb[0].mxu0
    %1667 = vmatprep.mubr.bf16.mxu0 0
    %1668 = vmatmul.mubr.bf16.gmra.mrb[0].mxu0 %v1571
    %v1669 = vpop.f32.mrb[0].mxu0
    %v1670 = vadd.f32 %v589, %v1669
    %v1671 = vpop.f32.mrb[0].mxu0
    %v1672 = vpop.f32.mrb[0].mxu0
    %v1673 = vadd.f32 %v590, %v1672
    %v1674 = vpop.f32.mrb[0].mxu0
    %1675 = vmatprep.mubr.bf16.mxu0 0
    %1676 = vmatmul.mubr.bf16.gmra.mrb[0].mxu0 %v1574
    %v1677 = vpop.f32.mrb[0].mxu0
    %v1678 = vadd.f32 %v591, %v1677
    %v1679 = vpop.f32.mrb[0].mxu0
    %v1680 = vpop.f32.mrb[0].mxu0
    %v1681 = vpop.f32.mrb[0].mxu0
    %1682 = vdwg.mxu0
    %v1683 = vpack.c.bf16 %v1617, %v1614
    %v1684 = vpack.c.bf16 %v1625, %v1622
    %v1685 = vpack.c.bf16 %v1633, %v1630
    %v1686 = vpack.c.bf16 %v1641, %v1638
    %v1687 = vpack.c.bf16 %v1649, %v1646
    %v1688 = vpack.c.bf16 %v1657, %v1654
    %v1689 = vpack.c.bf16 %v1665, %v1662
    %v1690 = vpack.c.bf16 %v1673, %v1670
    %v1691 = vpack.c.bf16 %v1678, %v1678
    %v1708 = vunpack.c.l.b16 %v149
    %v1709 = vunpack.c.l.b16 %v150
    %v1710 = vunpack.c.l.b16 %v151
    %v1711 = vunpack.c.l.b16 %v152
    %v1712 = vunpack.c.l.b16 %v153
    %v1713 = vunpack.c.l.b16 %v154
    %v1714 = vunpack.c.l.b16 %v155
    %v1715 = vunpack.c.l.b16 %v156
    %v1716 = vunpack.c.l.b16 %v157
    %v1717 = vunpack.c.l.b16 %v158
    %v1718 = vunpack.c.l.b16 %v159
    %v1719 = vunpack.c.l.b16 %v160
    %v1720 = vunpack.c.l.b16 %v161
    %v1721 = vunpack.c.l.b16 %v162
    %v1722 = vunpack.c.l.b16 %v163
    %v1723 = vunpack.c.l.b16 %v164
    %v1724 = vpack.c.b16 %v1709, %v1708
    %v1725 = vpack.c.b16 %v1711, %v1710
    %v1726 = vpack.c.b16 %v1713, %v1712
    %v1727 = vpack.c.b16 %v1715, %v1714
    %v1728 = vpack.c.b16 %v1717, %v1716
    %v1729 = vpack.c.b16 %v1719, %v1718
    %v1730 = vpack.c.b16 %v1721, %v1720
    %v1731 = vpack.c.b16 %v1723, %v1722
    %1740 = vmatprep.subr.bf16.mxu0 0
    %1741 = vmatpush1.bf16.msra.mxu0 %v1724
    %1742 = vmatprep.subr.bf16.mxu0 0
    %1743 = vmatpush1.bf16.msra.mxu0 %v1725
    %1744 = vmatprep.subr.bf16.mxu0 0
    %1745 = vmatpush1.bf16.msra.mxu0 %v1726
    %1746 = vmatprep.subr.bf16.mxu0 0
    %1747 = vmatpush1.bf16.msra.mxu0 %v1727
    %1748 = vmatprep.subr.bf16.mxu0 0
    %1749 = vmatpush1.bf16.msra.mxu0 %v1728
    %1750 = vmatprep.subr.bf16.mxu0 0
    %1751 = vmatpush1.bf16.msra.mxu0 %v1729
    %1752 = vmatprep.subr.bf16.mxu0 0
    %1753 = vmatpush1.bf16.msra.mxu0 %v1730
    %1754 = vmatprep.subr.bf16.mxu0 0
    %1755 = vmatpush1.bf16.msra.mxu0 %v1731
    %1756 = vmatprep.subr.bf16.mxu0 0
    %1757 = vmatpush1.bf16.msra.mxu0 0
    %1758 = vmatprep.subr.bf16.mxu0 0
    %1759 = vmatpush1.bf16.msra.mxu0 0
    %1760 = vmatprep.subr.bf16.mxu0 0
    %1761 = vmatpush1.bf16.msra.mxu0 0
    %1762 = vmatprep.subr.bf16.mxu0 0
    %1763 = vmatpush1.bf16.msra.mxu0 0
    %1764 = vmatprep.subr.bf16.mxu0 0
    %1765 = vmatpush1.bf16.msra.mxu0 0
    %1766 = vmatprep.subr.bf16.mxu0 0
    %1767 = vmatpush1.bf16.msra.mxu0 0
    %1768 = vmatprep.subr.bf16.mxu0 0
    %1769 = vmatpush1.bf16.msra.mxu0 0
    %1770 = vmatprep.subr.bf16.mxu0 0
    %1771 = vmatpush1.bf16.msra.mxu0 0
    %1772 = vmatprep.mubr.bf16.mxu0 0
    %1773 = vmatmul.mubr.bf16.gmra.mrb[0].mxu0 %v1683
    %v1774 = vpop.f32.mrb[0].mxu0
    %v1775 = vadd.f32 0.0, %v1774
    %v1776 = vpop.f32.mrb[0].mxu0
    %v1777 = vpop.f32.mrb[0].mxu0
    %v1778 = vadd.f32 0.0, %v1777
    %v1779 = vpop.f32.mrb[0].mxu0
    %1780 = vmatprep.mubr.bf16.mxu0 0
    %1781 = vmatmul.mubr.bf16.gmra.mrb[0].mxu0 %v1684
    %v1782 = vpop.f32.mrb[0].mxu0
    %v1783 = vadd.f32 0.0, %v1782
    %v1784 = vpop.f32.mrb[0].mxu0
    %v1785 = vpop.f32.mrb[0].mxu0
    %v1786 = vadd.f32 0.0, %v1785
    %v1787 = vpop.f32.mrb[0].mxu0
    %1788 = vmatprep.mubr.bf16.mxu0 0
    %1789 = vmatmul.mubr.bf16.gmra.mrb[0].mxu0 %v1685
    %v1790 = vpop.f32.mrb[0].mxu0
    %v1791 = vadd.f32 0.0, %v1790
    %v1792 = vpop.f32.mrb[0].mxu0
    %v1793 = vpop.f32.mrb[0].mxu0
    %v1794 = vadd.f32 0.0, %v1793
    %v1795 = vpop.f32.mrb[0].mxu0
    %1796 = vmatprep.mubr.bf16.mxu0 0
    %1797 = vmatmul.mubr.bf16.gmra.mrb[0].mxu0 %v1686
    %v1798 = vpop.f32.mrb[0].mxu0
    %v1799 = vadd.f32 0.0, %v1798
    %v1800 = vpop.f32.mrb[0].mxu0
    %v1801 = vpop.f32.mrb[0].mxu0
    %v1802 = vadd.f32 0.0, %v1801
    %v1803 = vpop.f32.mrb[0].mxu0
    %1804 = vmatprep.mubr.bf16.mxu0 0
    %1805 = vmatmul.mubr.bf16.gmra.mrb[0].mxu0 %v1687
    %v1806 = vpop.f32.mrb[0].mxu0
    %v1807 = vadd.f32 0.0, %v1806
    %v1808 = vpop.f32.mrb[0].mxu0
    %v1809 = vpop.f32.mrb[0].mxu0
    %v1810 = vadd.f32 0.0, %v1809
    %v1811 = vpop.f32.mrb[0].mxu0
    %1812 = vmatprep.mubr.bf16.mxu0 0
    %1813 = vmatmul.mubr.bf16.gmra.mrb[0].mxu0 %v1688
    %v1814 = vpop.f32.mrb[0].mxu0
    %v1815 = vadd.f32 0.0, %v1814
    %v1816 = vpop.f32.mrb[0].mxu0
    %v1817 = vpop.f32.mrb[0].mxu0
    %v1818 = vadd.f32 0.0, %v1817
    %v1819 = vpop.f32.mrb[0].mxu0
    %1820 = vmatprep.mubr.bf16.mxu0 0
    %1821 = vmatmul.mubr.bf16.gmra.mrb[0].mxu0 %v1689
    %v1822 = vpop.f32.mrb[0].mxu0
    %v1823 = vadd.f32 0.0, %v1822
    %v1824 = vpop.f32.mrb[0].mxu0
    %v1825 = vpop.f32.mrb[0].mxu0
    %v1826 = vadd.f32 0.0, %v1825
    %v1827 = vpop.f32.mrb[0].mxu0
    %1828 = vmatprep.mubr.bf16.mxu0 0
    %1829 = vmatmul.mubr.bf16.gmra.mrb[0].mxu0 %v1690
    %v1830 = vpop.f32.mrb[0].mxu0
    %v1831 = vadd.f32 0.0, %v1830
    %v1832 = vpop.f32.mrb[0].mxu0
    %v1833 = vpop.f32.mrb[0].mxu0
    %v1834 = vadd.f32 0.0, %v1833
    %v1835 = vpop.f32.mrb[0].mxu0
    %1836 = vmatprep.mubr.bf16.mxu0 0
    %1837 = vmatmul.mubr.bf16.gmra.mrb[0].mxu0 %v1691
    %v1838 = vpop.f32.mrb[0].mxu0
    %v1839 = vadd.f32 0.0, %v1838
    %v1840 = vpop.f32.mrb[0].mxu0
    %v1841 = vpop.f32.mrb[0].mxu0
    %v1842 = vpop.f32.mrb[0].mxu0
    %1843 = vdwg.mxu0
    %v1844 = vpack.c.bf16 %v1778, %v1775
    %v1845 = vpack.c.bf16 %v1786, %v1783
    %v1846 = vpack.c.bf16 %v1794, %v1791
    %v1847 = vpack.c.bf16 %v1802, %v1799
    %v1848 = vpack.c.bf16 %v1810, %v1807
    %v1849 = vpack.c.bf16 %v1818, %v1815
    %v1850 = vpack.c.bf16 %v1826, %v1823
    %v1851 = vpack.c.bf16 %v1834, %v1831
    %v1852 = vpack.c.bf16 %v1839, %v1839
    %v1853 = vlaneseq
    %v1854 = vshrl.u32 %v1853, 7
    %v1855 = vsub.s32 0, %v1854
    %v1856 = vrot.slane %v169, %v1855
    %v1858 = vsel %vm302, %v1852, 0
    %1860 = vmatprep.subr.bf16.mxu0 0
    %1861 = vmatpush1.bf16.msra.mxu0 %v1844
    %1862 = vmatprep.subr.bf16.mxu0 0
    %1863 = vmatpush1.bf16.msra.mxu0 %v1845
    %1864 = vmatprep.subr.bf16.mxu0 0
    %1865 = vmatpush1.bf16.msra.mxu0 %v1846
    %1866 = vmatprep.subr.bf16.mxu0 0
    %1867 = vmatpush1.bf16.msra.mxu0 %v1847
    %1868 = vmatprep.subr.bf16.mxu0 0
    %1869 = vmatpush1.bf16.msra.mxu0 %v1848
    %1870 = vmatprep.subr.bf16.mxu0 0
    %1871 = vmatpush1.bf16.msra.mxu0 %v1849
    %1872 = vmatprep.subr.bf16.mxu0 0
    %1873 = vmatpush1.bf16.msra.mxu0 %v1850
    %1874 = vmatprep.subr.bf16.mxu0 0
    %1875 = vmatpush1.bf16.msra.mxu0 %v1851
    %1876 = vmatprep.subr.bf16.mxu0 0
    %1877 = vmatpush1.bf16.msra.mxu0 %v1858
    %1878 = vmatprep.subr.bf16.mxu0 0
    %1879 = vmatpush1.bf16.msra.mxu0 0
    %1880 = vmatprep.subr.bf16.mxu0 0
    %1881 = vmatpush1.bf16.msra.mxu0 0
    %1882 = vmatprep.subr.bf16.mxu0 0
    %1883 = vmatpush1.bf16.msra.mxu0 0
    %1884 = vmatprep.subr.bf16.mxu0 0
    %1885 = vmatpush1.bf16.msra.mxu0 0
    %1886 = vmatprep.subr.bf16.mxu0 0
    %1887 = vmatpush1.bf16.msra.mxu0 0
    %1888 = vmatprep.subr.bf16.mxu0 0
    %1889 = vmatpush1.bf16.msra.mxu0 0
    %1890 = vmatprep.subr.bf16.mxu0 0
    %1891 = vmatpush1.bf16.msra.mxu0 0
    %1892 = vmatprep.mubr.bf16.mxu0 %v276
    %1893 = vmatmul.mubr.bf16.gmra.mrb[0].mxu0 %v247
    %v1894 = vpop.f32.mrb[0].mxu0
    %v1895 = vadd.f32 %v1856, %v1894
    %v1896 = vpop.f32.mrb[0].mxu0
    %v1897 = vpop.f32.mrb[0].mxu0
    %v1898 = vadd.f32 %v1856, %v1897
    %v1899 = vpop.f32.mrb[0].mxu0
    %1900 = vmatprep.mubr.bf16.mxu0 %v279
    %1901 = vmatmul.mubr.bf16.gmra.mrb[0].mxu0 %v249
    %v1902 = vpop.f32.mrb[0].mxu0
    %v1903 = vadd.f32 %v1856, %v1902
    %v1904 = vpop.f32.mrb[0].mxu0
    %v1905 = vpop.f32.mrb[0].mxu0
    %v1906 = vadd.f32 %v1856, %v1905
    %v1907 = vpop.f32.mrb[0].mxu0
    %1908 = vmatprep.mubr.bf16.mxu0 %v282
    %1909 = vmatmul.mubr.bf16.gmra.mrb[0].mxu0 %v251
    %v1910 = vpop.f32.mrb[0].mxu0
    %v1911 = vadd.f32 %v1856, %v1910
    %v1912 = vpop.f32.mrb[0].mxu0
    %v1913 = vpop.f32.mrb[0].mxu0
    %v1914 = vadd.f32 %v1856, %v1913
    %v1915 = vpop.f32.mrb[0].mxu0
    %1916 = vmatprep.mubr.bf16.mxu0 %v285
    %1917 = vmatmul.mubr.bf16.gmra.mrb[0].mxu0 %v253
    %v1918 = vpop.f32.mrb[0].mxu0
    %v1919 = vadd.f32 %v1856, %v1918
    %v1920 = vpop.f32.mrb[0].mxu0
    %v1921 = vpop.f32.mrb[0].mxu0
    %v1922 = vadd.f32 %v1856, %v1921
    %v1923 = vpop.f32.mrb[0].mxu0
    %1924 = vmatprep.mubr.bf16.mxu0 %v288
    %1925 = vmatmul.mubr.bf16.gmra.mrb[0].mxu0 %v255
    %v1926 = vpop.f32.mrb[0].mxu0
    %v1927 = vadd.f32 %v1856, %v1926
    %v1928 = vpop.f32.mrb[0].mxu0
    %v1929 = vpop.f32.mrb[0].mxu0
    %v1930 = vadd.f32 %v1856, %v1929
    %v1931 = vpop.f32.mrb[0].mxu0
    %1932 = vmatprep.mubr.bf16.mxu0 %v291
    %1933 = vmatmul.mubr.bf16.gmra.mrb[0].mxu0 %v257
    %v1934 = vpop.f32.mrb[0].mxu0
    %v1935 = vadd.f32 %v1856, %v1934
    %v1936 = vpop.f32.mrb[0].mxu0
    %v1937 = vpop.f32.mrb[0].mxu0
    %v1938 = vadd.f32 %v1856, %v1937
    %v1939 = vpop.f32.mrb[0].mxu0
    %1940 = vmatprep.mubr.bf16.mxu0 %v294
    %1941 = vmatmul.mubr.bf16.gmra.mrb[0].mxu0 %v259
    %v1942 = vpop.f32.mrb[0].mxu0
    %v1943 = vadd.f32 %v1856, %v1942
    %v1944 = vpop.f32.mrb[0].mxu0
    %v1945 = vpop.f32.mrb[0].mxu0
    %v1946 = vadd.f32 %v1856, %v1945
    %v1947 = vpop.f32.mrb[0].mxu0
    %1948 = vmatprep.mubr.bf16.mxu0 %v297
    %1949 = vmatmul.mubr.bf16.gmra.mrb[0].mxu0 %v261
    %v1950 = vpop.f32.mrb[0].mxu0
    %v1951 = vadd.f32 %v1856, %v1950
    %v1952 = vpop.f32.mrb[0].mxu0
    %v1953 = vpop.f32.mrb[0].mxu0
    %v1954 = vadd.f32 %v1856, %v1953
    %v1955 = vpop.f32.mrb[0].mxu0
    %1956 = vmatprep.mubr.bf16.mxu0 %v300
    %1957 = vmatmul.mubr.bf16.gmra.mrb[0].mxu0 %v263
    %v1958 = vpop.f32.mrb[0].mxu0
    %v1959 = vadd.f32 %v1856, %v1958
    %v1960 = vpop.f32.mrb[0].mxu0
    %v1961 = vpop.f32.mrb[0].mxu0
    %v1962 = vpop.f32.mrb[0].mxu0
    %1963 = vdwg.mxu0
    %v1964 = vmax.f32 %v1895, 0.0
    %v1965 = vmax.f32 %v1898, 0.0
    %v1966 = vmax.f32 %v1903, 0.0
    %v1967 = vmax.f32 %v1906, 0.0
    %v1968 = vmax.f32 %v1911, 0.0
    %v1969 = vmax.f32 %v1914, 0.0
    %v1970 = vmax.f32 %v1919, 0.0
    %v1971 = vmax.f32 %v1922, 0.0
    %v1972 = vmax.f32 %v1927, 0.0
    %v1973 = vmax.f32 %v1930, 0.0
    %v1974 = vmax.f32 %v1935, 0.0
    %v1975 = vmax.f32 %v1938, 0.0
    %v1976 = vmax.f32 %v1943, 0.0
    %v1977 = vmax.f32 %v1946, 0.0
    %v1978 = vmax.f32 %v1951, 0.0
    %v1979 = vmax.f32 %v1954, 0.0
    %v1980 = vmax.f32 %v1959, 0.0
    %v1981 = vadd.f32 %v1964, %v170
    %v1982 = vadd.f32 %v1965, %v171
    %v1983 = vadd.f32 %v1966, %v172
    %v1984 = vadd.f32 %v1967, %v173
    %v1985 = vadd.f32 %v1968, %v174
    %v1986 = vadd.f32 %v1969, %v175
    %v1987 = vadd.f32 %v1970, %v176
    %v1988 = vadd.f32 %v1971, %v177
    %v1989 = vadd.f32 %v1972, %v178
    %v1990 = vadd.f32 %v1973, %v179
    %v1991 = vadd.f32 %v1974, %v180
    %v1992 = vadd.f32 %v1975, %v181
    %v1993 = vadd.f32 %v1976, %v182
    %v1994 = vadd.f32 %v1977, %v183
    %v1995 = vadd.f32 %v1978, %v184
    %v1996 = vadd.f32 %v1979, %v185
    %v1997 = vadd.f32 %v1980, %v186
    %1998 = vst [vmem:[#allocation2] sm:$0xff] %v1981
    %1999 = vst [vmem:[#allocation2 + $0x8] sm:$0xff] %v1982
    %2000 = vst [vmem:[#allocation2 + $0x10] sm:$0xff] %v1983
    %2001 = vst [vmem:[#allocation2 + $0x18] sm:$0xff] %v1984
    %2002 = vst [vmem:[#allocation2 + $0x20] sm:$0xff] %v1985
    %2003 = vst [vmem:[#allocation2 + $0x28] sm:$0xff] %v1986
    %2004 = vst [vmem:[#allocation2 + $0x30] sm:$0xff] %v1987
    %2005 = vst [vmem:[#allocation2 + $0x38] sm:$0xff] %v1988
    %2006 = vst [vmem:[#allocation2 + $0x40] sm:$0xff] %v1989
    %2007 = vst [vmem:[#allocation2 + $0x48] sm:$0xff] %v1990
    %2008 = vst [vmem:[#allocation2 + $0x50] sm:$0xff] %v1991
    %2009 = vst [vmem:[#allocation2 + $0x58] sm:$0xff] %v1992
    %2010 = vst [vmem:[#allocation2 + $0x60] sm:$0xff] %v1993
    %2011 = vst [vmem:[#allocation2 + $0x68] sm:$0xff] %v1994
    %2012 = vst [vmem:[#allocation2 + $0x70] sm:$0xff] %v1995
    %2013 = vst [vmem:[#allocation2 + $0x78] sm:$0xff] %v1996
    %2014 = vst [vmem:[#allocation2 + $0x80] sm:$0xff] %v1997
    // Predicated region
    $region18: #{tpu_custom_call.1} parent=1 // pred_check
      _
    $region19: #{tpu_custom_call.1} parent=1 // pred_check_branch
      %2016 = sbr.rel (0) target = $region21
    $region20: #{tpu_custom_call.1} parent=1 // pred_region
      %s2018 = ssub.s32 2176, 2176
      %2019 = vsyncadd [#allocation3], %s2018
      %s2020 = sshll.u32 [#allocation2], 4
      %s2021 = int_to_ptr.vmem [resolvable:$true] %s2020
      %2026 = dma.vmem_to_hbm [thread:$0]  %s2021, 2176, %s4, [#allocation3], 128, 128, 8
    $region21: #{tpu_custom_call.1} parent=1 // pred_fallthru
      _
    // Predicated region
    $region22: #{tpu_custom_call.1} parent=1 // pred_check
      _
    $region23: #{tpu_custom_call.1} parent=1 // pred_check_branch
      %2028 = sbr.rel (0) target = $region25
    $region24: #{tpu_custom_call.1} parent=1 // pred_region
      %2029 = dma.done [#allocation3], 2176
    $region25: #{tpu_custom_call.1} parent=1 // pred_fallthru
      _
    %2030 = vsyncpa [#allocation3], 1

</llo_original>
